<compile_context>
chip_gen: v5e
topology: v5e:2x2
jax: 0.10.0
libtpu: 0.0.40
codegen_flags: <defaults>
</compile_context>

<pallas_src>
import functools

import jax
import jax.numpy as jnp
from jax.experimental import pallas as pl
from jax.experimental.pallas import tpu as pltpu

_SELU_ALPHA = 1.6732632423543772848170429916717
_SELU_SCALE = 1.0507009873554804934193349852946


def _selu_f32(x):
    # alpha * (exp(min(x,0)) - 1) keeps the unselected branch finite.
    neg = _SELU_ALPHA * (jnp.exp(jnp.minimum(x, 0.0)) - 1.0)
    return _SELU_SCALE * jnp.where(x > 0, x, neg)


# ----------------------------- Pallas kernels --------------------------------
def _layer1_kernel(p_ref, w_ref, b_ref, o_ref):
    # p_ref: (M1, 36) bf16, w_ref: (36, 32) bf16, b_ref: (1, 32) f32
    acc = jnp.dot(p_ref[...], w_ref[...], preferred_element_type=jnp.float32)
    o_ref[...] = _selu_f32(acc + b_ref[...]).astype(o_ref.dtype)


def _fused_l234_kernel(p2_ref, w2_ref, b2_ref, w3_ref, b3_ref, w4_ref, b4_ref,
                       o2_ref, o3_ref, o4_ref):
    """Layers 2, 3, 4 chained entirely inside VMEM.

    Row orderings (prepared by the wrapper):
      p2 / o2 rows: (kh3, kw3, kh4, kw4, n, h4, w4)   -> 16 * M4 rows
      o3 rows     : (kh4, kw4, n, h4, w4)             ->  4 * M4 rows
      o4 rows     : (n, h4, w4)                       ->       M4 rows
    so layers 3 and 4 consume contiguous, 8-aligned row blocks of the previous
    activation (no in-kernel transposes / gathers).
    """
    m3 = o3_ref.shape[0]
    m4 = o4_ref.shape[0]

    # ---- layer 2: (16*M4, 288) @ (288, 64) ----
    acc2 = jnp.dot(p2_ref[...], w2_ref[...], preferred_element_type=jnp.float32)
    h2 = _selu_f32(acc2 + b2_ref[...])                     # f32 (128, 64)
    o2_ref[...] = h2.astype(o2_ref.dtype)

    # ---- layer 3: sum over the 4 (kh3, kw3) row blocks ----
    acc3 = None
    for s in range(4):
        blk = h2[s * m3:(s + 1) * m3, :].astype(jnp.bfloat16)
        d = jnp.dot(blk, w3_ref[s], preferred_element_type=jnp.float32)
        acc3 = d if acc3 is None else acc3 + d
    h3 = _selu_f32(acc3 + b3_ref[...])                     # f32 (32, 128)
    o3_ref[...] = h3.astype(o3_ref.dtype)

    # ---- layer 4: sum over the 4 (kh4, kw4) row blocks ----
    acc4 = None
    for q in range(4):
        blk = h3[q * m4:(q + 1) * m4, :].astype(jnp.bfloat16)
        d = jnp.dot(blk, w4_ref[q], preferred_element_type=jnp.float32)
        acc4 = d if acc4 is None else acc4 + d
    o4_ref[...] = _selu_f32(acc4 + b4_ref[...]).astype(o4_ref.dtype)


# ----------------------------- pallas_call wrappers ---------------------------
def _full_spec(shape):
    nd = len(shape)
    return pl.BlockSpec(tuple(shape), lambda i: (0,) * nd)


def _layer1_matmul(p1, w1b, b1):
    m, k = p1.shape
    c = w1b.shape[1]
    return pl.pallas_call(
        _layer1_kernel,
        out_shape=jax.ShapeDtypeStruct((m, c), jnp.bfloat16),
        grid=(1,),
        in_specs=[_full_spec((m, k)), _full_spec((k, c)), _full_spec((1, c))],
        out_specs=_full_spec((m, c)),
        compiler_params=pltpu.CompilerParams(dimension_semantics=("arbitrary",)),
    )(p1, w1b, b1.reshape(1, c))


def _fused_l234(p2, w2b, b2, w3b, b3, w4b, b4):
    m2, k2 = p2.shape
    c2, c3, c4 = w2b.shape[1], w3b.shape[2], w4b.shape[2]
    m3, m4 = m2 // 4, m2 // 16
    return pl.pallas_call(
        _fused_l234_kernel,
        out_shape=(jax.ShapeDtypeStruct((m2, c2), jnp.bfloat16),
                   jax.ShapeDtypeStruct((m3, c3), jnp.bfloat16),
                   jax.ShapeDtypeStruct((m4, c4), jnp.bfloat16)),
        grid=(1,),
        in_specs=[_full_spec((m2, k2)),
                  _full_spec(w2b.shape), _full_spec((1, c2)),
                  _full_spec(w3b.shape), _full_spec((1, c3)),
                  _full_spec(w4b.shape), _full_spec((1, c4))],
        out_specs=(_full_spec((m2, c2)), _full_spec((m3, c3)), _full_spec((m4, c4))),
        compiler_params=pltpu.CompilerParams(dimension_semantics=("arbitrary",)),
    )(p2, w2b, b2.reshape(1, c2), w3b, b3.reshape(1, c3), w4b, b4.reshape(1, c4))


# ------------------------------ JAX glue --------------------------------------
def _im2col(x_nhwc, kh, kw, stride, pad):
    """im2col as ONE fused XLA op: conv with a constant 0/1 one-hot kernel.

    With bf16 inputs this is an exact gather of the bf16 activations (one
    nonzero product per output feature); feature order is (kh, kw, c), c fastest.
    """
    c = x_nhwc.shape[-1]
    k = kh * kw * c
    onehot = jnp.eye(k, dtype=x_nhwc.dtype).reshape(kh, kw, c, k)
    return jax.lax.conv_general_dilated(
        x_nhwc, onehot, (stride, stride), [(pad, pad), (pad, pad)],
        dimension_numbers=("NHWC", "HWIO", "NHWC"))


@functools.partial(jax.jit, static_argnums=(2,))
def cnn_encoder(x_nchw, params, paddings):
    """Mirror of CnnEncoder.forward: returns (conv1_out, ..., conv4_out) in NCHW."""
    (w1, b1), (w2, b2), (w3, b3), (w4, b4) = params
    assert paddings[2] == 0 and paddings[3] == 0, "fused L3/L4 path assumes pad 0"

    n = x_nchw.shape[0]
    x = jnp.transpose(x_nchw, (0, 2, 3, 1)).astype(jnp.bfloat16)   # NHWC, bf16

    # ------------------------- layer 1 -------------------------
    pat1 = _im2col(x, 3, 3, 1, paddings[0])                        # (N,H1,W1,36)
    _, h1s, w1s, k1 = pat1.shape
    w1b = w1.reshape(k1, w1.shape[-1]).astype(jnp.bfloat16)
    a1 = _layer1_matmul(pat1.reshape(n * h1s * w1s, k1), w1b, b1)  # (512,32) bf16
    c1 = a1.shape[1]
    conv1 = jnp.transpose(a1.reshape(n, h1s, w1s, c1),
                          (0, 3, 1, 2)).astype(jnp.float32)

    # --------------------- layers 2 + 3 + 4 (one fused kernel) ---------------
    pat2 = _im2col(a1.reshape(n, h1s, w1s, c1), 3, 3, 2, paddings[1])  # (N,H2,W2,288)
    _, h2s, w2s, k2 = pat2.shape
    assert h2s % 4 == 0 and w2s % 4 == 0
    h4s, w4s = h2s // 4, w2s // 4
    # rows -> (kh3, kw3, kh4, kw4, n, h4, w4); h2 = 4*h4 + 2*kh4 + kh3 (same for w).
    p2 = (pat2.reshape(n, h4s, 2, 2, w4s, 2, 2, k2)       # (n,h4,kh4,kh3,w4,kw4,kw3,F)
              .transpose(3, 6, 2, 5, 0, 1, 4, 7)          # (kh3,kw3,kh4,kw4,n,h4,w4,F)
              .reshape(16 * n * h4s * w4s, k2))

    w2b = w2.reshape(k2, w2.shape[-1]).astype(jnp.bfloat16)             # (288, 64)
    w3b = w3.reshape(4, w3.shape[2], w3.shape[3]).astype(jnp.bfloat16)  # (4, 64,128)
    w4b = w4.reshape(4, w4.shape[2], w4.shape[3]).astype(jnp.bfloat16)  # (4,128,256)

    o2, o3, o4 = _fused_l234(p2, w2b, b2, w3b, b3, w4b, b4)

    c2, c3, c4 = o2.shape[1], o3.shape[1], o4.shape[1]
    conv2 = (o2.reshape(2, 2, 2, 2, n, h4s, w4s, c2)      # (kh3,kw3,kh4,kw4,n,h4,w4,c)
               .transpose(4, 7, 5, 2, 0, 6, 3, 1)          # (n,c,h4,kh4,kh3,w4,kw4,kw3)
               .reshape(n, c2, 4 * h4s, 4 * w4s)
               .astype(jnp.float32))
    conv3 = (o3.reshape(2, 2, n, h4s, w4s, c3)             # (kh4,kw4,n,h4,w4,c)
               .transpose(2, 5, 3, 0, 4, 1)                 # (n,c,h4,kh4,w4,kw4)
               .reshape(n, c3, 2 * h4s, 2 * w4s)
               .astype(jnp.float32))
    conv4 = (o4.reshape(n, h4s, w4s, c4)
               .transpose(0, 3, 1, 2)
               .astype(jnp.float32))
    return conv1, conv2, conv3, conv4


# ------------------------- pure-JAX reference (check) ------------------------
def _ref_encoder(x_nchw, params, paddings):
    """Reference with the same numerics: bf16 operands, f32 accumulate/bias/SELU,
    bf16 activation chain (returned copies upcast to f32)."""
    strides = (1, 2, 2, 2)
    h = jnp.transpose(x_nchw, (0, 2, 3, 1)).astype(jnp.bfloat16)
    outs = []
    for (w, b), s, p in zip(params, strides, paddings):
        y = jax.lax.conv_general_dilated(
            h, w.astype(jnp.bfloat16), (s, s), [(p, p), (p, p)],
            dimension_numbers=("NHWC", "HWIO", "NHWC"),
            preferred_element_type=jnp.float32)
        h = jax.nn.selu(y + b).astype(jnp.bfloat16)
        outs.append(jnp.transpose(h, (0, 3, 1, 2)).astype(jnp.float32))
    return tuple(outs)


# ---------------------------------- main -------------------------------------
if __name__ == "__main__":
    key = jax.random.PRNGKey(0)
    N, Cin, H, W = 2, 4, 16, 16
    paddings = (1, 1, 0, 0)  # padding per conv layer (nn.Conv2d padding arg)

    kx, *pkeys = jax.random.split(key, 9)
    x = jax.random.normal(kx, (N, Cin, H, W), dtype=jnp.float32)

    # deterministic parameter init; HWIO weight layout, shapes match nn.Conv2d
    layer_defs = [(3, Cin, 32), (3, 32, 64), (2, 64, 128), (2, 128, 256)]
    params = []
    for li, (k, ci, co) in enumerate(layer_defs):
        wkey, bkey = pkeys[2 * li], pkeys[2 * li + 1]
        fan_in = k * k * ci
        w = jax.random.normal(wkey, (k, k, ci, co), jnp.float32) / jnp.sqrt(fan_in)
        b = 0.01 * jax.random.normal(bkey, (co,), jnp.float32)
        params.append((w, b))
    params = tuple(params)

    outs = jax.block_until_ready(cnn_encoder(x, params, paddings))

    expected_shapes = [(2, 32, 16, 16), (2, 64, 8, 8), (2, 128, 4, 4), (2, 256, 2, 2)]
    refs = _ref_encoder(x, params, paddings)
    for o, r, es in zip(outs, refs, expected_shapes):
        assert o.shape == es, (o.shape, es)
        assert o.dtype == jnp.float32, o.dtype
        max_err = float(jnp.max(jnp.abs(o - r)))
        assert jnp.allclose(o, r, rtol=2e-2, atol=2e-2), ("mismatch", es, max_err)

    print("KERNEL_OK")
</pallas_src>

<mosaic_0001>
module attributes {stable_mosaic.version = 11 : i64} {
  func.func @_layer1_kernel(%arg0: i32, %arg1: memref<512x36xbf16, #tpu.memory_space<vmem>>, %arg2: memref<36x32xbf16, #tpu.memory_space<vmem>>, %arg3: memref<1x32xf32, #tpu.memory_space<vmem>>, %arg4: memref<512x32xbf16, #tpu.memory_space<vmem>>) attributes {dimension_semantics = [#tpu.dimension_semantics<arbitrary>], iteration_bounds = array<i64: 1>, scalar_prefetch = 0 : i64, scratch_operands = 0 : i64, tpu.core_type = #tpu.core_type<tc>, window_params = [{pipeline_mode = #tpu.pipeline_mode<synchronous>, transform_indices = @transform_0, window_bounds = array<i64: 512, 36>}, {pipeline_mode = #tpu.pipeline_mode<synchronous>, transform_indices = @transform_1, window_bounds = array<i64: 36, 32>}, {pipeline_mode = #tpu.pipeline_mode<synchronous>, transform_indices = @transform_2, window_bounds = array<i64: 1, 32>}, {pipeline_mode = #tpu.pipeline_mode<synchronous>, transform_indices = @transform_3, window_bounds = array<i64: 512, 32>}]} {
    %c0 = arith.constant 0 : index
    %c0_0 = arith.constant 0 : index
    %0 = vector.load %arg1[%c0, %c0_0] : memref<512x36xbf16, #tpu.memory_space<vmem>>, vector<512x36xbf16>
    %c0_1 = arith.constant 0 : index
    %c0_2 = arith.constant 0 : index
    %1 = vector.load %arg2[%c0_1, %c0_2] : memref<36x32xbf16, #tpu.memory_space<vmem>>, vector<36x32xbf16>
    %cst = arith.constant dense<0.000000e+00> : vector<512x32xf32>
    %2 = tpu.matmul %0, %1, %cst {dimension_numbers = #tpu.dot_dimension_numbers<[1], [0], [0], [1], [0, 0, 1, 1], [], []>} : vector<512x36xbf16>, vector<36x32xbf16>, vector<512x32xf32> -> vector<512x32xf32>
    %c0_3 = arith.constant 0 : index
    %c0_4 = arith.constant 0 : index
    %3 = vector.load %arg3[%c0_3, %c0_4] : memref<1x32xf32, #tpu.memory_space<vmem>>, vector<1x32xf32>
    %4 = vector.broadcast %3 : vector<1x32xf32> to vector<512x32xf32>
    %5 = arith.addf %2, %4 : vector<512x32xf32>
    %cst_5 = arith.constant 0.000000e+00 : f32
    %6 = vector.broadcast %cst_5 : f32 to vector<512x32xf32>
    %7 = arith.minimumf %5, %6 : vector<512x32xf32>
    %8 = math.exp %7 : vector<512x32xf32>
    %cst_6 = arith.constant 1.000000e+00 : f32
    %9 = vector.broadcast %cst_6 : f32 to vector<512x32xf32>
    %10 = arith.subf %8, %9 : vector<512x32xf32>
    %cst_7 = arith.constant 1.67326319 : f32
    %11 = vector.broadcast %cst_7 : f32 to vector<512x32xf32>
    %12 = arith.mulf %11, %10 : vector<512x32xf32>
    %cst_8 = arith.constant 0.000000e+00 : f32
    %13 = vector.broadcast %cst_8 : f32 to vector<512x32xf32>
    %14 = arith.cmpf ogt, %5, %13 : vector<512x32xf32>
    %15 = arith.select %14, %5, %12 : vector<512x32xi1>, vector<512x32xf32>
    %cst_9 = arith.constant 1.05070102 : f32
    %16 = vector.broadcast %cst_9 : f32 to vector<512x32xf32>
    %17 = arith.mulf %16, %15 : vector<512x32xf32>
    %18 = arith.truncf %17 : vector<512x32xf32> to vector<512x32xbf16>
    %c0_10 = arith.constant 0 : index
    %c0_11 = arith.constant 0 : index
    %19 = vector.load %arg4[%c0_10, %c0_11] : memref<512x32xbf16, #tpu.memory_space<vmem>>, vector<512x32xbf16>
    tpu.vector_store %arg4[%c0_10, %c0_11], %18 {strides = array<i32>} : memref<512x32xbf16, #tpu.memory_space<vmem>>, vector<512x32xbf16>,
    return
  }
  func.func @transform_0(%arg0: i32) -> (i32, i32) {
    %c0_i32 = arith.constant 0 : i32
    %c0_i32_0 = arith.constant 0 : i32
    %c0_i32_1 = arith.constant 0 : i32
    return %c0_i32, %c0_i32_0 : i32, i32
  }
  func.func @transform_1(%arg0: i32) -> (i32, i32) {
    %c0_i32 = arith.constant 0 : i32
    %c0_i32_0 = arith.constant 0 : i32
    %c0_i32_1 = arith.constant 0 : i32
    return %c0_i32, %c0_i32_0 : i32, i32
  }
  func.func @transform_2(%arg0: i32) -> (i32, i32) {
    %c0_i32 = arith.constant 0 : i32
    %c0_i32_0 = arith.constant 0 : i32
    %c0_i32_1 = arith.constant 0 : i32
    return %c0_i32, %c0_i32_0 : i32, i32
  }
  func.func @transform_3(%arg0: i32) -> (i32, i32) {
    %c0_i32 = arith.constant 0 : i32
    %c0_i32_0 = arith.constant 0 : i32
    %c0_i32_1 = arith.constant 0 : i32
    return %c0_i32, %c0_i32_0 : i32, i32
  }
}

module attributes {stable_mosaic.version = 11 : i64} {
  func.func @_fused_l234_kernel(%arg0: i32, %arg1: memref<128x288xbf16, #tpu.memory_space<vmem>>, %arg2: memref<288x64xbf16, #tpu.memory_space<vmem>>, %arg3: memref<1x64xf32, #tpu.memory_space<vmem>>, %arg4: memref<4x64x128xbf16, #tpu.memory_space<vmem>>, %arg5: memref<1x128xf32, #tpu.memory_space<vmem>>, %arg6: memref<4x128x256xbf16, #tpu.memory_space<vmem>>, %arg7: memref<1x256xf32, #tpu.memory_space<vmem>>, %arg8: memref<128x64xbf16, #tpu.memory_space<vmem>>, %arg9: memref<32x128xbf16, #tpu.memory_space<vmem>>, %arg10: memref<8x256xbf16, #tpu.memory_space<vmem>>) attributes {dimension_semantics = [#tpu.dimension_semantics<arbitrary>], iteration_bounds = array<i64: 1>, scalar_prefetch = 0 : i64, scratch_operands = 0 : i64, tpu.core_type = #tpu.core_type<tc>, window_params = [{pipeline_mode = #tpu.pipeline_mode<synchronous>, transform_indices = @transform_0, window_bounds = array<i64: 128, 288>}, {pipeline_mode = #tpu.pipeline_mode<synchronous>, transform_indices = @transform_1, window_bounds = array<i64: 288, 64>}, {pipeline_mode = #tpu.pipeline_mode<synchronous>, transform_indices = @transform_2, window_bounds = array<i64: 1, 64>}, {pipeline_mode = #tpu.pipeline_mode<synchronous>, transform_indices = @transform_3, window_bounds = array<i64: 4, 64, 128>}, {pipeline_mode = #tpu.pipeline_mode<synchronous>, transform_indices = @transform_4, window_bounds = array<i64: 1, 128>}, {pipeline_mode = #tpu.pipeline_mode<synchronous>, transform_indices = @transform_5, window_bounds = array<i64: 4, 128, 256>}, {pipeline_mode = #tpu.pipeline_mode<synchronous>, transform_indices = @transform_6, window_bounds = array<i64: 1, 256>}, {pipeline_mode = #tpu.pipeline_mode<synchronous>, transform_indices = @transform_7, window_bounds = array<i64: 128, 64>}, {pipeline_mode = #tpu.pipeline_mode<synchronous>, transform_indices = @transform_8, window_bounds = array<i64: 32, 128>}, {pipeline_mode = #tpu.pipeline_mode<synchronous>, transform_indices = @transform_9, window_bounds = array<i64: 8, 256>}]} {
    %c0 = arith.constant 0 : index
    %c0_0 = arith.constant 0 : index
    %0 = vector.load %arg1[%c0, %c0_0] : memref<128x288xbf16, #tpu.memory_space<vmem>>, vector<128x288xbf16>
    %c0_1 = arith.constant 0 : index
    %c0_2 = arith.constant 0 : index
    %1 = vector.load %arg2[%c0_1, %c0_2] : memref<288x64xbf16, #tpu.memory_space<vmem>>, vector<288x64xbf16>
    %cst = arith.constant dense<0.000000e+00> : vector<128x64xf32>
    %2 = tpu.matmul %0, %1, %cst {dimension_numbers = #tpu.dot_dimension_numbers<[1], [0], [0], [1], [0, 0, 1, 1], [], []>} : vector<128x288xbf16>, vector<288x64xbf16>, vector<128x64xf32> -> vector<128x64xf32>
    %c0_3 = arith.constant 0 : index
    %c0_4 = arith.constant 0 : index
    %3 = vector.load %arg3[%c0_3, %c0_4] : memref<1x64xf32, #tpu.memory_space<vmem>>, vector<1x64xf32>
    %4 = vector.broadcast %3 : vector<1x64xf32> to vector<128x64xf32>
    %5 = arith.addf %2, %4 : vector<128x64xf32>
    %cst_5 = arith.constant 0.000000e+00 : f32
    %6 = vector.broadcast %cst_5 : f32 to vector<128x64xf32>
    %7 = arith.minimumf %5, %6 : vector<128x64xf32>
    %8 = math.exp %7 : vector<128x64xf32>
    %cst_6 = arith.constant 1.000000e+00 : f32
    %9 = vector.broadcast %cst_6 : f32 to vector<128x64xf32>
    %10 = arith.subf %8, %9 : vector<128x64xf32>
    %cst_7 = arith.constant 1.67326319 : f32
    %11 = vector.broadcast %cst_7 : f32 to vector<128x64xf32>
    %12 = arith.mulf %11, %10 : vector<128x64xf32>
    %cst_8 = arith.constant 0.000000e+00 : f32
    %13 = vector.broadcast %cst_8 : f32 to vector<128x64xf32>
    %14 = arith.cmpf ogt, %5, %13 : vector<128x64xf32>
    %15 = arith.select %14, %5, %12 : vector<128x64xi1>, vector<128x64xf32>
    %cst_9 = arith.constant 1.05070102 : f32
    %16 = vector.broadcast %cst_9 : f32 to vector<128x64xf32>
    %17 = arith.mulf %16, %15 : vector<128x64xf32>
    %18 = arith.truncf %17 : vector<128x64xf32> to vector<128x64xbf16>
    %c0_10 = arith.constant 0 : index
    %c0_11 = arith.constant 0 : index
    %19 = vector.load %arg8[%c0_10, %c0_11] : memref<128x64xbf16, #tpu.memory_space<vmem>>, vector<128x64xbf16>
    tpu.vector_store %arg8[%c0_10, %c0_11], %18 {strides = array<i32>} : memref<128x64xbf16, #tpu.memory_space<vmem>>, vector<128x64xbf16>,
    %20 = vector.extract_strided_slice %17 {offsets = [0, 0], sizes = [32, 64], strides = [1, 1]} : vector<128x64xf32> to vector<32x64xf32>
    %21 = arith.truncf %20 : vector<32x64xf32> to vector<32x64xbf16>
    %c0_12 = arith.constant 0 : index
    %c0_13 = arith.constant 0 : index
    %c0_14 = arith.constant 0 : index
    %22 = vector.load %arg4[%c0_12, %c0_13, %c0_14] : memref<4x64x128xbf16, #tpu.memory_space<vmem>>, vector<1x64x128xbf16>
    %23 = vector.shape_cast %22 : vector<1x64x128xbf16> to vector<64x128xbf16>
    %cst_15 = arith.constant dense<0.000000e+00> : vector<32x128xf32>
    %24 = tpu.matmul %21, %23, %cst_15 {dimension_numbers = #tpu.dot_dimension_numbers<[1], [0], [0], [1], [0, 0, 1, 1], [], []>} : vector<32x64xbf16>, vector<64x128xbf16>, vector<32x128xf32> -> vector<32x128xf32>
    %25 = vector.extract_strided_slice %17 {offsets = [32, 0], sizes = [32, 64], strides = [1, 1]} : vector<128x64xf32> to vector<32x64xf32>
    %26 = arith.truncf %25 : vector<32x64xf32> to vector<32x64xbf16>
    %c1 = arith.constant 1 : index
    %c0_16 = arith.constant 0 : index
    %c0_17 = arith.constant 0 : index
    %27 = vector.load %arg4[%c1, %c0_16, %c0_17] : memref<4x64x128xbf16, #tpu.memory_space<vmem>>, vector<1x64x128xbf16>
    %28 = vector.shape_cast %27 : vector<1x64x128xbf16> to vector<64x128xbf16>
    %cst_18 = arith.constant dense<0.000000e+00> : vector<32x128xf32>
    %29 = tpu.matmul %26, %28, %cst_18 {dimension_numbers = #tpu.dot_dimension_numbers<[1], [0], [0], [1], [0, 0, 1, 1], [], []>} : vector<32x64xbf16>, vector<64x128xbf16>, vector<32x128xf32> -> vector<32x128xf32>
    %30 = arith.addf %24, %29 : vector<32x128xf32>
    %31 = vector.extract_strided_slice %17 {offsets = [64, 0], sizes = [32, 64], strides = [1, 1]} : vector<128x64xf32> to vector<32x64xf32>
    %32 = arith.truncf %31 : vector<32x64xf32> to vector<32x64xbf16>
    %c2 = arith.constant 2 : index
    %c0_19 = arith.constant 0 : index
    %c0_20 = arith.constant 0 : index
    %33 = vector.load %arg4[%c2, %c0_19, %c0_20] : memref<4x64x128xbf16, #tpu.memory_space<vmem>>, vector<1x64x128xbf16>
    %34 = vector.shape_cast %33 : vector<1x64x128xbf16> to vector<64x128xbf16>
    %cst_21 = arith.constant dense<0.000000e+00> : vector<32x128xf32>
    %35 = tpu.matmul %32, %34, %cst_21 {dimension_numbers = #tpu.dot_dimension_numbers<[1], [0], [0], [1], [0, 0, 1, 1], [], []>} : vector<32x64xbf16>, vector<64x128xbf16>, vector<32x128xf32> -> vector<32x128xf32>
    %36 = arith.addf %30, %35 : vector<32x128xf32>
    %37 = vector.extract_strided_slice %17 {offsets = [96, 0], sizes = [32, 64], strides = [1, 1]} : vector<128x64xf32> to vector<32x64xf32>
    %38 = arith.truncf %37 : vector<32x64xf32> to vector<32x64xbf16>
    %c3 = arith.constant 3 : index
    %c0_22 = arith.constant 0 : index
    %c0_23 = arith.constant 0 : index
    %39 = vector.load %arg4[%c3, %c0_22, %c0_23] : memref<4x64x128xbf16, #tpu.memory_space<vmem>>, vector<1x64x128xbf16>
    %40 = vector.shape_cast %39 : vector<1x64x128xbf16> to vector<64x128xbf16>
    %cst_24 = arith.constant dense<0.000000e+00> : vector<32x128xf32>
    %41 = tpu.matmul %38, %40, %cst_24 {dimension_numbers = #tpu.dot_dimension_numbers<[1], [0], [0], [1], [0, 0, 1, 1], [], []>} : vector<32x64xbf16>, vector<64x128xbf16>, vector<32x128xf32> -> vector<32x128xf32>
    %42 = arith.addf %36, %41 : vector<32x128xf32>
    %c0_25 = arith.constant 0 : index
    %c0_26 = arith.constant 0 : index
    %43 = vector.load %arg5[%c0_25, %c0_26] : memref<1x128xf32, #tpu.memory_space<vmem>>, vector<1x128xf32>
    %44 = vector.broadcast %43 : vector<1x128xf32> to vector<32x128xf32>
    %45 = arith.addf %42, %44 : vector<32x128xf32>
    %cst_27 = arith.constant 0.000000e+00 : f32
    %46 = vector.broadcast %cst_27 : f32 to vector<32x128xf32>
    %47 = arith.minimumf %45, %46 : vector<32x128xf32>
    %48 = math.exp %47 : vector<32x128xf32>
    %cst_28 = arith.constant 1.000000e+00 : f32
    %49 = vector.broadcast %cst_28 : f32 to vector<32x128xf32>
    %50 = arith.subf %48, %49 : vector<32x128xf32>
    %cst_29 = arith.constant 1.67326319 : f32
    %51 = vector.broadcast %cst_29 : f32 to vector<32x128xf32>
    %52 = arith.mulf %51, %50 : vector<32x128xf32>
    %cst_30 = arith.constant 0.000000e+00 : f32
    %53 = vector.broadcast %cst_30 : f32 to vector<32x128xf32>
    %54 = arith.cmpf ogt, %45, %53 : vector<32x128xf32>
    %55 = arith.select %54, %45, %52 : vector<32x128xi1>, vector<32x128xf32>
    %cst_31 = arith.constant 1.05070102 : f32
    %56 = vector.broadcast %cst_31 : f32 to vector<32x128xf32>
    %57 = arith.mulf %56, %55 : vector<32x128xf32>
    %58 = arith.truncf %57 : vector<32x128xf32> to vector<32x128xbf16>
    %c0_32 = arith.constant 0 : index
    %c0_33 = arith.constant 0 : index
    %59 = vector.load %arg9[%c0_32, %c0_33] : memref<32x128xbf16, #tpu.memory_space<vmem>>, vector<32x128xbf16>
    tpu.vector_store %arg9[%c0_32, %c0_33], %58 {strides = array<i32>} : memref<32x128xbf16, #tpu.memory_space<vmem>>, vector<32x128xbf16>,
    %60 = vector.extract_strided_slice %57 {offsets = [0, 0], sizes = [8, 128], strides = [1, 1]} : vector<32x128xf32> to vector<8x128xf32>
    %61 = arith.truncf %60 : vector<8x128xf32> to vector<8x128xbf16>
    %c0_34 = arith.constant 0 : index
    %c0_35 = arith.constant 0 : index
    %c0_36 = arith.constant 0 : index
    %62 = vector.load %arg6[%c0_34, %c0_35, %c0_36] : memref<4x128x256xbf16, #tpu.memory_space<vmem>>, vector<1x128x256xbf16>
    %63 = vector.shape_cast %62 : vector<1x128x256xbf16> to vector<128x256xbf16>
    %cst_37 = arith.constant dense<0.000000e+00> : vector<8x256xf32>
    %64 = tpu.matmul %61, %63, %cst_37 {dimension_numbers = #tpu.dot_dimension_numbers<[1], [0], [0], [1], [0, 0, 1, 1], [], []>} : vector<8x128xbf16>, vector<128x256xbf16>, vector<8x256xf32> -> vector<8x256xf32>
    %65 = vector.extract_strided_slice %57 {offsets = [8, 0], sizes = [8, 128], strides = [1, 1]} : vector<32x128xf32> to vector<8x128xf32>
    %66 = arith.truncf %65 : vector<8x128xf32> to vector<8x128xbf16>
    %c1_38 = arith.constant 1 : index
    %c0_39 = arith.constant 0 : index
    %c0_40 = arith.constant 0 : index
    %67 = vector.load %arg6[%c1_38, %c0_39, %c0_40] : memref<4x128x256xbf16, #tpu.memory_space<vmem>>, vector<1x128x256xbf16>
    %68 = vector.shape_cast %67 : vector<1x128x256xbf16> to vector<128x256xbf16>
    %cst_41 = arith.constant dense<0.000000e+00> : vector<8x256xf32>
    %69 = tpu.matmul %66, %68, %cst_41 {dimension_numbers = #tpu.dot_dimension_numbers<[1], [0], [0], [1], [0, 0, 1, 1], [], []>} : vector<8x128xbf16>, vector<128x256xbf16>, vector<8x256xf32> -> vector<8x256xf32>
    %70 = arith.addf %64, %69 : vector<8x256xf32>
    %71 = vector.extract_strided_slice %57 {offsets = [16, 0], sizes = [8, 128], strides = [1, 1]} : vector<32x128xf32> to vector<8x128xf32>
    %72 = arith.truncf %71 : vector<8x128xf32> to vector<8x128xbf16>
    %c2_42 = arith.constant 2 : index
    %c0_43 = arith.constant 0 : index
    %c0_44 = arith.constant 0 : index
    %73 = vector.load %arg6[%c2_42, %c0_43, %c0_44] : memref<4x128x256xbf16, #tpu.memory_space<vmem>>, vector<1x128x256xbf16>
    %74 = vector.shape_cast %73 : vector<1x128x256xbf16> to vector<128x256xbf16>
    %cst_45 = arith.constant dense<0.000000e+00> : vector<8x256xf32>
    %75 = tpu.matmul %72, %74, %cst_45 {dimension_numbers = #tpu.dot_dimension_numbers<[1], [0], [0], [1], [0, 0, 1, 1], [], []>} : vector<8x128xbf16>, vector<128x256xbf16>, vector<8x256xf32> -> vector<8x256xf32>
    %76 = arith.addf %70, %75 : vector<8x256xf32>
    %77 = vector.extract_strided_slice %57 {offsets = [24, 0], sizes = [8, 128], strides = [1, 1]} : vector<32x128xf32> to vector<8x128xf32>
    %78 = arith.truncf %77 : vector<8x128xf32> to vector<8x128xbf16>
    %c3_46 = arith.constant 3 : index
    %c0_47 = arith.constant 0 : index
    %c0_48 = arith.constant 0 : index
    %79 = vector.load %arg6[%c3_46, %c0_47, %c0_48] : memref<4x128x256xbf16, #tpu.memory_space<vmem>>, vector<1x128x256xbf16>
    %80 = vector.shape_cast %79 : vector<1x128x256xbf16> to vector<128x256xbf16>
    %cst_49 = arith.constant dense<0.000000e+00> : vector<8x256xf32>
    %81 = tpu.matmul %78, %80, %cst_49 {dimension_numbers = #tpu.dot_dimension_numbers<[1], [0], [0], [1], [0, 0, 1, 1], [], []>} : vector<8x128xbf16>, vector<128x256xbf16>, vector<8x256xf32> -> vector<8x256xf32>
    %82 = arith.addf %76, %81 : vector<8x256xf32>
    %c0_50 = arith.constant 0 : index
    %c0_51 = arith.constant 0 : index
    %83 = vector.load %arg7[%c0_50, %c0_51] : memref<1x256xf32, #tpu.memory_space<vmem>>, vector<1x256xf32>
    %84 = vector.broadcast %83 : vector<1x256xf32> to vector<8x256xf32>
    %85 = arith.addf %82, %84 : vector<8x256xf32>
    %cst_52 = arith.constant 0.000000e+00 : f32
    %86 = vector.broadcast %cst_52 : f32 to vector<8x256xf32>
    %87 = arith.minimumf %85, %86 : vector<8x256xf32>
    %88 = math.exp %87 : vector<8x256xf32>
    %cst_53 = arith.constant 1.000000e+00 : f32
    %89 = vector.broadcast %cst_53 : f32 to vector<8x256xf32>
    %90 = arith.subf %88, %89 : vector<8x256xf32>
    %cst_54 = arith.constant 1.67326319 : f32
    %91 = vector.broadcast %cst_54 : f32 to vector<8x256xf32>
    %92 = arith.mulf %91, %90 : vector<8x256xf32>
    %cst_55 = arith.constant 0.000000e+00 : f32
    %93 = vector.broadcast %cst_55 : f32 to vector<8x256xf32>
    %94 = arith.cmpf ogt, %85, %93 : vector<8x256xf32>
    %95 = arith.select %94, %85, %92 : vector<8x256xi1>, vector<8x256xf32>
    %cst_56 = arith.constant 1.05070102 : f32
    %96 = vector.broadcast %cst_56 : f32 to vector<8x256xf32>
    %97 = arith.mulf %96, %95 : vector<8x256xf32>
    %98 = arith.truncf %97 : vector<8x256xf32> to vector<8x256xbf16>
    %c0_57 = arith.constant 0 : index
    %c0_58 = arith.constant 0 : index
    %99 = vector.load %arg10[%c0_57, %c0_58] : memref<8x256xbf16, #tpu.memory_space<vmem>>, vector<8x256xbf16>
    tpu.vector_store %arg10[%c0_57, %c0_58], %98 {strides = array<i32>} : memref<8x256xbf16, #tpu.memory_space<vmem>>, vector<8x256xbf16>,
    return
  }
  func.func @transform_0(%arg0: i32) -> (i32, i32) {
    %c0_i32 = arith.constant 0 : i32
    %c0_i32_0 = arith.constant 0 : i32
    %c0_i32_1 = arith.constant 0 : i32
    return %c0_i32, %c0_i32_0 : i32, i32
  }
  func.func @transform_1(%arg0: i32) -> (i32, i32) {
    %c0_i32 = arith.constant 0 : i32
    %c0_i32_0 = arith.constant 0 : i32
    %c0_i32_1 = arith.constant 0 : i32
    return %c0_i32, %c0_i32_0 : i32, i32
  }
  func.func @transform_2(%arg0: i32) -> (i32, i32) {
    %c0_i32 = arith.constant 0 : i32
    %c0_i32_0 = arith.constant 0 : i32
    %c0_i32_1 = arith.constant 0 : i32
    return %c0_i32, %c0_i32_0 : i32, i32
  }
  func.func @transform_3(%arg0: i32) -> (i32, i32, i32) {
    %c0_i32 = arith.constant 0 : i32
    %c0_i32_0 = arith.constant 0 : i32
    %c0_i32_1 = arith.constant 0 : i32
    %c0_i32_2 = arith.constant 0 : i32
    return %c0_i32, %c0_i32_0, %c0_i32_1 : i32, i32, i32
  }
  func.func @transform_4(%arg0: i32) -> (i32, i32) {
    %c0_i32 = arith.constant 0 : i32
    %c0_i32_0 = arith.constant 0 : i32
    %c0_i32_1 = arith.constant 0 : i32
    return %c0_i32, %c0_i32_0 : i32, i32
  }
  func.func @transform_5(%arg0: i32) -> (i32, i32, i32) {
    %c0_i32 = arith.constant 0 : i32
    %c0_i32_0 = arith.constant 0 : i32
    %c0_i32_1 = arith.constant 0 : i32
    %c0_i32_2 = arith.constant 0 : i32
    return %c0_i32, %c0_i32_0, %c0_i32_1 : i32, i32, i32
  }
  func.func @transform_6(%arg0: i32) -> (i32, i32) {
    %c0_i32 = arith.constant 0 : i32
    %c0_i32_0 = arith.constant 0 : i32
    %c0_i32_1 = arith.constant 0 : i32
    return %c0_i32, %c0_i32_0 : i32, i32
  }
  func.func @transform_7(%arg0: i32) -> (i32, i32) {
    %c0_i32 = arith.constant 0 : i32
    %c0_i32_0 = arith.constant 0 : i32
    %c0_i32_1 = arith.constant 0 : i32
    return %c0_i32, %c0_i32_0 : i32, i32
  }
  func.func @transform_8(%arg0: i32) -> (i32, i32) {
    %c0_i32 = arith.constant 0 : i32
    %c0_i32_0 = arith.constant 0 : i32
    %c0_i32_1 = arith.constant 0 : i32
    return %c0_i32, %c0_i32_0 : i32, i32
  }
  func.func @transform_9(%arg0: i32) -> (i32, i32) {
    %c0_i32 = arith.constant 0 : i32
    %c0_i32_0 = arith.constant 0 : i32
    %c0_i32_1 = arith.constant 0 : i32
    return %c0_i32, %c0_i32_0 : i32, i32
  }
}

</mosaic_0001>

<llo_original>
// kernel: cnn_encoder.2
$region0: #{cnn_encoder.2}
  #allocation0 [shape = 'u32[]', space=smem, size = 0x4, offset = 0x4, fixed_abs, tag = 'smem constant byte address 0x4 - core index']
  #allocation1 [shape = 'u32[72,128]{1,0:T(1,128)}', space=vmem, size = 0x9000, scoped, tag = 'internal scratch']
  %s0 = inlined_call_operand.vmem [shape: bf16[512,36], index: 0, kind: input, shape index: {}]
  %s1 = inlined_call_operand.vmem [shape: bf16[36,32], index: 1, kind: input, shape index: {}]
  %s2 = inlined_call_operand.vmem [shape: f32[1,32], index: 2, kind: input, shape index: {}]
  %s3 = inlined_call_operand.vmem [shape: bf16[512,32], index: 3, kind: output, shape index: {}]
  %s4 = sld [smem:[#allocation0]]
  $region22: #{cnn_encoder.2} parent=0
    _
  %s6 = ssub.s32 1, %s4
  %s7 = scalar_select 0, %s6, %s4
  // Predicated region
  $region2: #{cnn_encoder.2} parent=0 // pred_check
    _
  $region3: #{cnn_encoder.2} parent=0 // pred_check_branch
    %9 = sbr.rel (0) target = $region5
  $region4: #{cnn_encoder.2} parent=0 // pred_region
    _
  $region5: #{cnn_encoder.2} parent=0 // pred_fallthru
    _
  // Predicated region
  $region6: #{cnn_encoder.2} parent=0 // pred_check
    _
  $region7: #{cnn_encoder.2} parent=0 // pred_check_branch
    %11 = sbr.rel (0) target = $region9
  $region8: #{cnn_encoder.2} parent=0 // pred_region
    _
  $region9: #{cnn_encoder.2} parent=0 // pred_fallthru
    _
  // Predicated region
  $region10: #{cnn_encoder.2} parent=0 // pred_check
    _
  $region11: #{cnn_encoder.2} parent=0 // pred_check_branch
    %13 = sbr.rel (0) target = $region13
  $region12: #{cnn_encoder.2} parent=0 // pred_region
    _
  $region13: #{cnn_encoder.2} parent=0 // pred_fallthru
    _
  %v15 = vld [vmem:[%s0] sm:$0xf]
  %v16 = vld [vmem:[%s0 + $0x4] sm:$0xf]
  %v17 = vld [vmem:[%s0 + $0x8] sm:$0xf]
  %v18 = vld [vmem:[%s0 + $0xc] sm:$0xf]
  %v19 = vld [vmem:[%s0 + $0x10] sm:$0xf]
  %v20 = vld [vmem:[%s0 + $0x14] sm:$0xf]
  %v21 = vld [vmem:[%s0 + $0x18] sm:$0xf]
  %v22 = vld [vmem:[%s0 + $0x1c] sm:$0xf]
  %v23 = vld [vmem:[%s0 + $0x20] sm:$0xf]
  %v24 = vld [vmem:[%s0 + $0x24] sm:$0xf]
  %v25 = vld [vmem:[%s0 + $0x28] sm:$0xf]
  %v26 = vld [vmem:[%s0 + $0x2c] sm:$0xf]
  %v27 = vld [vmem:[%s0 + $0x30] sm:$0xf]
  %v28 = vld [vmem:[%s0 + $0x34] sm:$0xf]
  %v29 = vld [vmem:[%s0 + $0x38] sm:$0xf]
  %v30 = vld [vmem:[%s0 + $0x3c] sm:$0xf]
  %v31 = vld [vmem:[%s0 + $0x40] sm:$0xf]
  %v32 = vld [vmem:[%s0 + $0x44] sm:$0xf]
  %v33 = vld [vmem:[%s0 + $0x48] sm:$0xf]
  %v34 = vld [vmem:[%s0 + $0x4c] sm:$0xf]
  %v35 = vld [vmem:[%s0 + $0x50] sm:$0xf]
  %v36 = vld [vmem:[%s0 + $0x54] sm:$0xf]
  %v37 = vld [vmem:[%s0 + $0x58] sm:$0xf]
  %v38 = vld [vmem:[%s0 + $0x5c] sm:$0xf]
  %v39 = vld [vmem:[%s0 + $0x60] sm:$0xf]
  %v40 = vld [vmem:[%s0 + $0x64] sm:$0xf]
  %v41 = vld [vmem:[%s0 + $0x68] sm:$0xf]
  %v42 = vld [vmem:[%s0 + $0x6c] sm:$0xf]
  %v43 = vld [vmem:[%s0 + $0x70] sm:$0xf]
  %v44 = vld [vmem:[%s0 + $0x74] sm:$0xf]
  %v45 = vld [vmem:[%s0 + $0x78] sm:$0xf]
  %v46 = vld [vmem:[%s0 + $0x7c] sm:$0xf]
  %v47 = vld [vmem:[%s0 + $0x80] sm:$0xf]
  %v48 = vld [vmem:[%s0 + $0x84] sm:$0xf]
  %v49 = vld [vmem:[%s0 + $0x88] sm:$0xf]
  %v50 = vld [vmem:[%s0 + $0x8c] sm:$0xf]
  %v51 = vld [vmem:[%s0 + $0x90] sm:$0xf]
  %v52 = vld [vmem:[%s0 + $0x94] sm:$0xf]
  %v53 = vld [vmem:[%s0 + $0x98] sm:$0xf]
  %v54 = vld [vmem:[%s0 + $0x9c] sm:$0xf]
  %v55 = vld [vmem:[%s0 + $0xa0] sm:$0xf]
  %v56 = vld [vmem:[%s0 + $0xa4] sm:$0xf]
  %v57 = vld [vmem:[%s0 + $0xa8] sm:$0xf]
  %v58 = vld [vmem:[%s0 + $0xac] sm:$0xf]
  %v59 = vld [vmem:[%s0 + $0xb0] sm:$0xf]
  %v60 = vld [vmem:[%s0 + $0xb4] sm:$0xf]
  %v61 = vld [vmem:[%s0 + $0xb8] sm:$0xf]
  %v62 = vld [vmem:[%s0 + $0xbc] sm:$0xf]
  %v63 = vld [vmem:[%s0 + $0xc0] sm:$0xf]
  %v64 = vld [vmem:[%s0 + $0xc4] sm:$0xf]
  %v65 = vld [vmem:[%s0 + $0xc8] sm:$0xf]
  %v66 = vld [vmem:[%s0 + $0xcc] sm:$0xf]
  %v67 = vld [vmem:[%s0 + $0xd0] sm:$0xf]
  %v68 = vld [vmem:[%s0 + $0xd4] sm:$0xf]
  %v69 = vld [vmem:[%s0 + $0xd8] sm:$0xf]
  %v70 = vld [vmem:[%s0 + $0xdc] sm:$0xf]
  %v71 = vld [vmem:[%s0 + $0xe0] sm:$0xf]
  %v72 = vld [vmem:[%s0 + $0xe4] sm:$0xf]
  %v73 = vld [vmem:[%s0 + $0xe8] sm:$0xf]
  %v74 = vld [vmem:[%s0 + $0xec] sm:$0xf]
  %v75 = vld [vmem:[%s0 + $0xf0] sm:$0xf]
  %v76 = vld [vmem:[%s0 + $0xf4] sm:$0xf]
  %v77 = vld [vmem:[%s0 + $0xf8] sm:$0xf]
  %v78 = vld [vmem:[%s0 + $0xfc] sm:$0xf]
  %v79 = vld [vmem:[%s1] sm:$0xf]
  %v80 = vld [vmem:[%s1 + $0x4] sm:$0xf]
  %v81 = vld [vmem:[%s1 + $0x8] sm:$0xf]
  %v82 = vld [vmem:[%s1 + $0xc] sm:$0xf]
  %v83 = vld [vmem:[%s1 + $0x10] sm:$0x3]
  %v84 = vld [vmem:[%s2] sm:$0x1]
  %v86 = vperm.slane %v84, 0
  %v152 = vunpack.c.l.b16 %v15
  %v153 = vunpack.c.l.b16 %v16
  %v154 = vunpack.c.l.b16 %v17
  %v155 = vunpack.c.l.b16 %v18
  %v156 = vunpack.c.l.b16 %v19
  %v157 = vunpack.c.l.b16 %v20
  %v158 = vunpack.c.l.b16 %v21
  %v159 = vunpack.c.l.b16 %v22
  %v160 = vunpack.c.l.b16 %v23
  %v161 = vunpack.c.l.b16 %v24
  %v162 = vunpack.c.l.b16 %v25
  %v163 = vunpack.c.l.b16 %v26
  %v164 = vunpack.c.l.b16 %v27
  %v165 = vunpack.c.l.b16 %v28
  %v166 = vunpack.c.l.b16 %v29
  %v167 = vunpack.c.l.b16 %v30
  %v168 = vunpack.c.l.b16 %v31
  %v169 = vunpack.c.l.b16 %v32
  %v170 = vunpack.c.l.b16 %v33
  %v171 = vunpack.c.l.b16 %v34
  %v172 = vunpack.c.l.b16 %v35
  %v173 = vunpack.c.l.b16 %v36
  %v174 = vunpack.c.l.b16 %v37
  %v175 = vunpack.c.l.b16 %v38
  %v176 = vunpack.c.l.b16 %v39
  %v177 = vunpack.c.l.b16 %v40
  %v178 = vunpack.c.l.b16 %v41
  %v179 = vunpack.c.l.b16 %v42
  %v180 = vunpack.c.l.b16 %v43
  %v181 = vunpack.c.l.b16 %v44
  %v182 = vunpack.c.l.b16 %v45
  %v183 = vunpack.c.l.b16 %v46
  %v184 = vunpack.c.l.b16 %v47
  %v185 = vunpack.c.l.b16 %v48
  %v186 = vunpack.c.l.b16 %v49
  %v187 = vunpack.c.l.b16 %v50
  %v188 = vunpack.c.l.b16 %v51
  %v189 = vunpack.c.l.b16 %v52
  %v190 = vunpack.c.l.b16 %v53
  %v191 = vunpack.c.l.b16 %v54
  %v192 = vunpack.c.l.b16 %v55
  %v193 = vunpack.c.l.b16 %v56
  %v194 = vunpack.c.l.b16 %v57
  %v195 = vunpack.c.l.b16 %v58
  %v196 = vunpack.c.l.b16 %v59
  %v197 = vunpack.c.l.b16 %v60
  %v198 = vunpack.c.l.b16 %v61
  %v199 = vunpack.c.l.b16 %v62
  %v200 = vunpack.c.l.b16 %v63
  %v201 = vunpack.c.l.b16 %v64
  %v202 = vunpack.c.l.b16 %v65
  %v203 = vunpack.c.l.b16 %v66
  %v204 = vunpack.c.l.b16 %v67
  %v205 = vunpack.c.l.b16 %v68
  %v206 = vunpack.c.l.b16 %v69
  %v207 = vunpack.c.l.b16 %v70
  %v208 = vunpack.c.l.b16 %v71
  %v209 = vunpack.c.l.b16 %v72
  %v210 = vunpack.c.l.b16 %v73
  %v211 = vunpack.c.l.b16 %v74
  %v212 = vunpack.c.l.b16 %v75
  %v213 = vunpack.c.l.b16 %v76
  %v214 = vunpack.c.l.b16 %v77
  %v215 = vunpack.c.l.b16 %v78
  %v216 = vpack.c.b16 %v153, %v152
  %v217 = vpack.c.b16 %v155, %v154
  %v218 = vpack.c.b16 %v157, %v156
  %v219 = vpack.c.b16 %v159, %v158
  %v220 = vpack.c.b16 %v161, %v160
  %v221 = vpack.c.b16 %v163, %v162
  %v222 = vpack.c.b16 %v165, %v164
  %v223 = vpack.c.b16 %v167, %v166
  %v224 = vpack.c.b16 %v169, %v168
  %v225 = vpack.c.b16 %v171, %v170
  %v226 = vpack.c.b16 %v173, %v172
  %v227 = vpack.c.b16 %v175, %v174
  %v228 = vpack.c.b16 %v177, %v176
  %v229 = vpack.c.b16 %v179, %v178
  %v230 = vpack.c.b16 %v181, %v180
  %v231 = vpack.c.b16 %v183, %v182
  %v232 = vpack.c.b16 %v185, %v184
  %v233 = vpack.c.b16 %v187, %v186
  %v234 = vpack.c.b16 %v189, %v188
  %v235 = vpack.c.b16 %v191, %v190
  %v236 = vpack.c.b16 %v193, %v192
  %v237 = vpack.c.b16 %v195, %v194
  %v238 = vpack.c.b16 %v197, %v196
  %v239 = vpack.c.b16 %v199, %v198
  %v240 = vpack.c.b16 %v201, %v200
  %v241 = vpack.c.b16 %v203, %v202
  %v242 = vpack.c.b16 %v205, %v204
  %v243 = vpack.c.b16 %v207, %v206
  %v244 = vpack.c.b16 %v209, %v208
  %v245 = vpack.c.b16 %v211, %v210
  %v246 = vpack.c.b16 %v213, %v212
  %v247 = vpack.c.b16 %v215, %v214
  %v253 = vunpack.c.l.b16 %v79
  %v254 = vunpack.c.l.b16 %v80
  %v255 = vunpack.c.l.b16 %v81
  %v256 = vunpack.c.l.b16 %v82
  %v257 = vunpack.c.l.b16 %v83
  %v258 = vpack.c.b16 %v254, %v253
  %v259 = vpack.c.b16 %v256, %v255
  %v260 = vpack.c.b16 %v257, %v257
  %vm263 = vcmask 293888
  %v265 = vsel %vm263, %v216, 0
  %v268 = vsel %vm263, %v217, 0
  %v271 = vsel %vm263, %v218, 0
  %v274 = vsel %vm263, %v219, 0
  %v277 = vsel %vm263, %v220, 0
  %v280 = vsel %vm263, %v221, 0
  %v283 = vsel %vm263, %v222, 0
  %v286 = vsel %vm263, %v223, 0
  %v289 = vsel %vm263, %v224, 0
  %v292 = vsel %vm263, %v225, 0
  %v295 = vsel %vm263, %v226, 0
  %v298 = vsel %vm263, %v227, 0
  %v301 = vsel %vm263, %v228, 0
  %v304 = vsel %vm263, %v229, 0
  %v307 = vsel %vm263, %v230, 0
  %v310 = vsel %vm263, %v231, 0
  %v313 = vsel %vm263, %v232, 0
  %v316 = vsel %vm263, %v233, 0
  %v319 = vsel %vm263, %v234, 0
  %v322 = vsel %vm263, %v235, 0
  %v325 = vsel %vm263, %v236, 0
  %v328 = vsel %vm263, %v237, 0
  %v331 = vsel %vm263, %v238, 0
  %v334 = vsel %vm263, %v239, 0
  %v337 = vsel %vm263, %v240, 0
  %v340 = vsel %vm263, %v241, 0
  %v343 = vsel %vm263, %v242, 0
  %v346 = vsel %vm263, %v243, 0
  %v349 = vsel %vm263, %v244, 0
  %v352 = vsel %vm263, %v245, 0
  %v355 = vsel %vm263, %v246, 0
  %v358 = vsel %vm263, %v247, 0
  %vm360 = vcmask 1041408
  %v362 = vsel %vm360, %v260, 0
  %364 = vmatpush.bf16.msra.mxu0 0
  %365 = vmatpush.bf16.msra.mxu0 0
  %366 = vmatpush.bf16.msra.mxu0 0
  %367 = vmatpush.bf16.msra.mxu0 0
  %368 = vmatpush.bf16.msra.mxu0 0
  %369 = vmatpush.bf16.msra.mxu0 %v362
  %370 = vmatpush.bf16.msra.mxu0 %v259
  %371 = vmatpush.bf16.msra.mxu0 %v258
  %372 = vmatmul.bf16.gmra.mxu0 %v265
  %v373 = vpop.f32.mrf.mxu0
  %v374 = vadd.f32 %v86, %v373
  %v375 = vpop.f32.mrf.mxu0
  %v376 = vadd.f32 %v86, %v375
  %377 = vmatmul.bf16.gmra.mxu0 %v268
  %v378 = vpop.f32.mrf.mxu0
  %v379 = vadd.f32 %v86, %v378
  %v380 = vpop.f32.mrf.mxu0
  %v381 = vadd.f32 %v86, %v380
  %382 = vmatmul.bf16.gmra.mxu0 %v271
  %v383 = vpop.f32.mrf.mxu0
  %v384 = vadd.f32 %v86, %v383
  %v385 = vpop.f32.mrf.mxu0
  %v386 = vadd.f32 %v86, %v385
  %387 = vmatmul.bf16.gmra.mxu0 %v274
  %v388 = vpop.f32.mrf.mxu0
  %v389 = vadd.f32 %v86, %v388
  %v390 = vpop.f32.mrf.mxu0
  %v391 = vadd.f32 %v86, %v390
  %392 = vmatmul.bf16.gmra.mxu0 %v277
  %v393 = vpop.f32.mrf.mxu0
  %v394 = vadd.f32 %v86, %v393
  %v395 = vpop.f32.mrf.mxu0
  %v396 = vadd.f32 %v86, %v395
  %397 = vmatmul.bf16.gmra.mxu0 %v280
  %v398 = vpop.f32.mrf.mxu0
  %v399 = vadd.f32 %v86, %v398
  %v400 = vpop.f32.mrf.mxu0
  %v401 = vadd.f32 %v86, %v400
  %402 = vmatmul.bf16.gmra.mxu0 %v283
  %v403 = vpop.f32.mrf.mxu0
  %v404 = vadd.f32 %v86, %v403
  %v405 = vpop.f32.mrf.mxu0
  %v406 = vadd.f32 %v86, %v405
  %407 = vmatmul.bf16.gmra.mxu0 %v286
  %v408 = vpop.f32.mrf.mxu0
  %v409 = vadd.f32 %v86, %v408
  %v410 = vpop.f32.mrf.mxu0
  %v411 = vadd.f32 %v86, %v410
  %412 = vmatmul.bf16.gmra.mxu0 %v289
  %v413 = vpop.f32.mrf.mxu0
  %v414 = vadd.f32 %v86, %v413
  %v415 = vpop.f32.mrf.mxu0
  %v416 = vadd.f32 %v86, %v415
  %417 = vmatmul.bf16.gmra.mxu0 %v292
  %v418 = vpop.f32.mrf.mxu0
  %v419 = vadd.f32 %v86, %v418
  %v420 = vpop.f32.mrf.mxu0
  %v421 = vadd.f32 %v86, %v420
  %422 = vmatmul.bf16.gmra.mxu0 %v295
  %v423 = vpop.f32.mrf.mxu0
  %v424 = vadd.f32 %v86, %v423
  %v425 = vpop.f32.mrf.mxu0
  %v426 = vadd.f32 %v86, %v425
  %427 = vmatmul.bf16.gmra.mxu0 %v298
  %v428 = vpop.f32.mrf.mxu0
  %v429 = vadd.f32 %v86, %v428
  %v430 = vpop.f32.mrf.mxu0
  %v431 = vadd.f32 %v86, %v430
  %432 = vmatmul.bf16.gmra.mxu0 %v301
  %v433 = vpop.f32.mrf.mxu0
  %v434 = vadd.f32 %v86, %v433
  %v435 = vpop.f32.mrf.mxu0
  %v436 = vadd.f32 %v86, %v435
  %437 = vmatmul.bf16.gmra.mxu0 %v304
  %v438 = vpop.f32.mrf.mxu0
  %v439 = vadd.f32 %v86, %v438
  %v440 = vpop.f32.mrf.mxu0
  %v441 = vadd.f32 %v86, %v440
  %442 = vmatmul.bf16.gmra.mxu0 %v307
  %v443 = vpop.f32.mrf.mxu0
  %v444 = vadd.f32 %v86, %v443
  %v445 = vpop.f32.mrf.mxu0
  %v446 = vadd.f32 %v86, %v445
  %447 = vmatmul.bf16.gmra.mxu0 %v310
  %v448 = vpop.f32.mrf.mxu0
  %v449 = vadd.f32 %v86, %v448
  %v450 = vpop.f32.mrf.mxu0
  %v451 = vadd.f32 %v86, %v450
  %452 = vmatmul.bf16.gmra.mxu0 %v313
  %v453 = vpop.f32.mrf.mxu0
  %v454 = vadd.f32 %v86, %v453
  %v455 = vpop.f32.mrf.mxu0
  %v456 = vadd.f32 %v86, %v455
  %457 = vmatmul.bf16.gmra.mxu0 %v316
  %v458 = vpop.f32.mrf.mxu0
  %v459 = vadd.f32 %v86, %v458
  %v460 = vpop.f32.mrf.mxu0
  %v461 = vadd.f32 %v86, %v460
  %462 = vmatmul.bf16.gmra.mxu0 %v319
  %v463 = vpop.f32.mrf.mxu0
  %v464 = vadd.f32 %v86, %v463
  %v465 = vpop.f32.mrf.mxu0
  %v466 = vadd.f32 %v86, %v465
  %467 = vmatmul.bf16.gmra.mxu0 %v322
  %v468 = vpop.f32.mrf.mxu0
  %v469 = vadd.f32 %v86, %v468
  %v470 = vpop.f32.mrf.mxu0
  %v471 = vadd.f32 %v86, %v470
  %472 = vmatmul.bf16.gmra.mxu0 %v325
  %v473 = vpop.f32.mrf.mxu0
  %v474 = vadd.f32 %v86, %v473
  %v475 = vpop.f32.mrf.mxu0
  %v476 = vadd.f32 %v86, %v475
  %477 = vmatmul.bf16.gmra.mxu0 %v328
  %v478 = vpop.f32.mrf.mxu0
  %v479 = vadd.f32 %v86, %v478
  %v480 = vpop.f32.mrf.mxu0
  %v481 = vadd.f32 %v86, %v480
  %482 = vmatmul.bf16.gmra.mxu0 %v331
  %v483 = vpop.f32.mrf.mxu0
  %v484 = vadd.f32 %v86, %v483
  %v485 = vpop.f32.mrf.mxu0
  %v486 = vadd.f32 %v86, %v485
  %487 = vmatmul.bf16.gmra.mxu0 %v334
  %v488 = vpop.f32.mrf.mxu0
  %v489 = vadd.f32 %v86, %v488
  %v490 = vpop.f32.mrf.mxu0
  %v491 = vadd.f32 %v86, %v490
  %492 = vmatmul.bf16.gmra.mxu0 %v337
  %v493 = vpop.f32.mrf.mxu0
  %v494 = vadd.f32 %v86, %v493
  %v495 = vpop.f32.mrf.mxu0
  %v496 = vadd.f32 %v86, %v495
  %497 = vmatmul.bf16.gmra.mxu0 %v340
  %v498 = vpop.f32.mrf.mxu0
  %v499 = vadd.f32 %v86, %v498
  %v500 = vpop.f32.mrf.mxu0
  %v501 = vadd.f32 %v86, %v500
  %502 = vmatmul.bf16.gmra.mxu0 %v343
  %v503 = vpop.f32.mrf.mxu0
  %v504 = vadd.f32 %v86, %v503
  %v505 = vpop.f32.mrf.mxu0
  %v506 = vadd.f32 %v86, %v505
  %507 = vmatmul.bf16.gmra.mxu0 %v346
  %v508 = vpop.f32.mrf.mxu0
  %v509 = vadd.f32 %v86, %v508
  %v510 = vpop.f32.mrf.mxu0
  %v511 = vadd.f32 %v86, %v510
  %512 = vmatmul.bf16.gmra.mxu0 %v349
  %v513 = vpop.f32.mrf.mxu0
  %v514 = vadd.f32 %v86, %v513
  %v515 = vpop.f32.mrf.mxu0
  %v516 = vadd.f32 %v86, %v515
  %517 = vmatmul.bf16.gmra.mxu0 %v352
  %v518 = vpop.f32.mrf.mxu0
  %v519 = vadd.f32 %v86, %v518
  %v520 = vpop.f32.mrf.mxu0
  %v521 = vadd.f32 %v86, %v520
  %522 = vmatmul.bf16.gmra.mxu0 %v355
  %v523 = vpop.f32.mrf.mxu0
  %v524 = vadd.f32 %v86, %v523
  %v525 = vpop.f32.mrf.mxu0
  %v526 = vadd.f32 %v86, %v525
  %527 = vmatmul.bf16.gmra.mxu0 %v358
  %v528 = vpop.f32.mrf.mxu0
  %v529 = vadd.f32 %v86, %v528
  %v530 = vpop.f32.mrf.mxu0
  %v531 = vadd.f32 %v86, %v530
  %532 = vdwg.mxu0
  %v533 = vmin.f32 %v374, 0.0
  %v534 = vmin.f32 %v376, 0.0
  %v535 = vmin.f32 %v379, 0.0
  %v536 = vmin.f32 %v381, 0.0
  %v537 = vmin.f32 %v384, 0.0
  %v538 = vmin.f32 %v386, 0.0
  %v539 = vmin.f32 %v389, 0.0
  %v540 = vmin.f32 %v391, 0.0
  %v541 = vmin.f32 %v394, 0.0
  %v542 = vmin.f32 %v396, 0.0
  %v543 = vmin.f32 %v399, 0.0
  %v544 = vmin.f32 %v401, 0.0
  %v545 = vmin.f32 %v404, 0.0
  %v546 = vmin.f32 %v406, 0.0
  %v547 = vmin.f32 %v409, 0.0
  %v548 = vmin.f32 %v411, 0.0
  %v549 = vmin.f32 %v414, 0.0
  %v550 = vmin.f32 %v416, 0.0
  %v551 = vmin.f32 %v419, 0.0
  %v552 = vmin.f32 %v421, 0.0
  %v553 = vmin.f32 %v424, 0.0
  %v554 = vmin.f32 %v426, 0.0
  %v555 = vmin.f32 %v429, 0.0
  %v556 = vmin.f32 %v431, 0.0
  %v557 = vmin.f32 %v434, 0.0
  %v558 = vmin.f32 %v436, 0.0
  %v559 = vmin.f32 %v439, 0.0
  %v560 = vmin.f32 %v441, 0.0
  %v561 = vmin.f32 %v444, 0.0
  %v562 = vmin.f32 %v446, 0.0
  %v563 = vmin.f32 %v449, 0.0
  %v564 = vmin.f32 %v451, 0.0
  %v565 = vmin.f32 %v454, 0.0
  %v566 = vmin.f32 %v456, 0.0
  %v567 = vmin.f32 %v459, 0.0
  %v568 = vmin.f32 %v461, 0.0
  %v569 = vmin.f32 %v464, 0.0
  %v570 = vmin.f32 %v466, 0.0
  %v571 = vmin.f32 %v469, 0.0
  %v572 = vmin.f32 %v471, 0.0
  %v573 = vmin.f32 %v474, 0.0
  %v574 = vmin.f32 %v476, 0.0
  %v575 = vmin.f32 %v479, 0.0
  %v576 = vmin.f32 %v481, 0.0
  %v577 = vmin.f32 %v484, 0.0
  %v578 = vmin.f32 %v486, 0.0
  %v579 = vmin.f32 %v489, 0.0
  %v580 = vmin.f32 %v491, 0.0
  %v581 = vmin.f32 %v494, 0.0
  %v582 = vmin.f32 %v496, 0.0
  %v583 = vmin.f32 %v499, 0.0
  %v584 = vmin.f32 %v501, 0.0
  %v585 = vmin.f32 %v504, 0.0
  %v586 = vmin.f32 %v506, 0.0
  %v587 = vmin.f32 %v509, 0.0
  %v588 = vmin.f32 %v511, 0.0
  %v589 = vmin.f32 %v514, 0.0
  %v590 = vmin.f32 %v516, 0.0
  %v591 = vmin.f32 %v519, 0.0
  %v592 = vmin.f32 %v521, 0.0
  %v593 = vmin.f32 %v524, 0.0
  %v594 = vmin.f32 %v526, 0.0
  %v595 = vmin.f32 %v529, 0.0
  %v596 = vmin.f32 %v531, 0.0
  %v597 = vmul.f32 %v533, 1.442695
  %v598 = vpow.pop %v597
  %v599 = vmul.f32 %v534, 1.442695
  %v600 = vpow.pop %v599
  %v601 = vmul.f32 %v535, 1.442695
  %v602 = vpow.pop %v601
  %v603 = vmul.f32 %v536, 1.442695
  %v604 = vpow.pop %v603
  %v605 = vmul.f32 %v537, 1.442695
  %v606 = vpow.pop %v605
  %v607 = vmul.f32 %v538, 1.442695
  %v608 = vpow.pop %v607
  %v609 = vmul.f32 %v539, 1.442695
  %v610 = vpow.pop %v609
  %v611 = vmul.f32 %v540, 1.442695
  %v612 = vpow.pop %v611
  %v613 = vmul.f32 %v541, 1.442695
  %v614 = vpow.pop %v613
  %v615 = vmul.f32 %v542, 1.442695
  %v616 = vpow.pop %v615
  %v617 = vmul.f32 %v543, 1.442695
  %v618 = vpow.pop %v617
  %v619 = vmul.f32 %v544, 1.442695
  %v620 = vpow.pop %v619
  %v621 = vmul.f32 %v545, 1.442695
  %v622 = vpow.pop %v621
  %v623 = vmul.f32 %v546, 1.442695
  %v624 = vpow.pop %v623
  %v625 = vmul.f32 %v547, 1.442695
  %v626 = vpow.pop %v625
  %v627 = vmul.f32 %v548, 1.442695
  %v628 = vpow.pop %v627
  %v629 = vmul.f32 %v549, 1.442695
  %v630 = vpow.pop %v629
  %v631 = vmul.f32 %v550, 1.442695
  %v632 = vpow.pop %v631
  %v633 = vmul.f32 %v551, 1.442695
  %v634 = vpow.pop %v633
  %v635 = vmul.f32 %v552, 1.442695
  %v636 = vpow.pop %v635
  %v637 = vmul.f32 %v553, 1.442695
  %v638 = vpow.pop %v637
  %v639 = vmul.f32 %v554, 1.442695
  %v640 = vpow.pop %v639
  %v641 = vmul.f32 %v555, 1.442695
  %v642 = vpow.pop %v641
  %v643 = vmul.f32 %v556, 1.442695
  %v644 = vpow.pop %v643
  %v645 = vmul.f32 %v557, 1.442695
  %v646 = vpow.pop %v645
  %v647 = vmul.f32 %v558, 1.442695
  %v648 = vpow.pop %v647
  %v649 = vmul.f32 %v559, 1.442695
  %v650 = vpow.pop %v649
  %v651 = vmul.f32 %v560, 1.442695
  %v652 = vpow.pop %v651
  %v653 = vmul.f32 %v561, 1.442695
  %v654 = vpow.pop %v653
  %v655 = vmul.f32 %v562, 1.442695
  %v656 = vpow.pop %v655
  %v657 = vmul.f32 %v563, 1.442695
  %v658 = vpow.pop %v657
  %v659 = vmul.f32 %v564, 1.442695
  %v660 = vpow.pop %v659
  %v661 = vmul.f32 %v565, 1.442695
  %v662 = vpow.pop %v661
  %v663 = vmul.f32 %v566, 1.442695
  %v664 = vpow.pop %v663
  %v665 = vmul.f32 %v567, 1.442695
  %v666 = vpow.pop %v665
  %v667 = vmul.f32 %v568, 1.442695
  %v668 = vpow.pop %v667
  %v669 = vmul.f32 %v569, 1.442695
  %v670 = vpow.pop %v669
  %v671 = vmul.f32 %v570, 1.442695
  %v672 = vpow.pop %v671
  %v673 = vmul.f32 %v571, 1.442695
  %v674 = vpow.pop %v673
  %v675 = vmul.f32 %v572, 1.442695
  %v676 = vpow.pop %v675
  %v677 = vmul.f32 %v573, 1.442695
  %v678 = vpow.pop %v677
  %v679 = vmul.f32 %v574, 1.442695
  %v680 = vpow.pop %v679
  %v681 = vmul.f32 %v575, 1.442695
  %v682 = vpow.pop %v681
  %v683 = vmul.f32 %v576, 1.442695
  %v684 = vpow.pop %v683
  %v685 = vmul.f32 %v577, 1.442695
  %v686 = vpow.pop %v685
  %v687 = vmul.f32 %v578, 1.442695
  %v688 = vpow.pop %v687
  %v689 = vmul.f32 %v579, 1.442695
  %v690 = vpow.pop %v689
  %v691 = vmul.f32 %v580, 1.442695
  %v692 = vpow.pop %v691
  %v693 = vmul.f32 %v581, 1.442695
  %v694 = vpow.pop %v693
  %v695 = vmul.f32 %v582, 1.442695
  %v696 = vpow.pop %v695
  %v697 = vmul.f32 %v583, 1.442695
  %v698 = vpow.pop %v697
  %v699 = vmul.f32 %v584, 1.442695
  %v700 = vpow.pop %v699
  %v701 = vmul.f32 %v585, 1.442695
  %v702 = vpow.pop %v701
  %v703 = vmul.f32 %v586, 1.442695
  %v704 = vpow.pop %v703
  %v705 = vmul.f32 %v587, 1.442695
  %v706 = vpow.pop %v705
  %v707 = vmul.f32 %v588, 1.442695
  %v708 = vpow.pop %v707
  %v709 = vmul.f32 %v589, 1.442695
  %v710 = vpow.pop %v709
  %v711 = vmul.f32 %v590, 1.442695
  %v712 = vpow.pop %v711
  %v713 = vmul.f32 %v591, 1.442695
  %v714 = vpow.pop %v713
  %v715 = vmul.f32 %v592, 1.442695
  %v716 = vpow.pop %v715
  %v717 = vmul.f32 %v593, 1.442695
  %v718 = vpow.pop %v717
  %v719 = vmul.f32 %v594, 1.442695
  %v720 = vpow.pop %v719
  %v721 = vmul.f32 %v595, 1.442695
  %v722 = vpow.pop %v721
  %v723 = vmul.f32 %v596, 1.442695
  %v724 = vpow.pop %v723
  %v725 = vsub.f32 %v598, 1.0
  %v726 = vsub.f32 %v600, 1.0
  %v727 = vsub.f32 %v602, 1.0
  %v728 = vsub.f32 %v604, 1.0
  %v729 = vsub.f32 %v606, 1.0
  %v730 = vsub.f32 %v608, 1.0
  %v731 = vsub.f32 %v610, 1.0
  %v732 = vsub.f32 %v612, 1.0
  %v733 = vsub.f32 %v614, 1.0
  %v734 = vsub.f32 %v616, 1.0
  %v735 = vsub.f32 %v618, 1.0
  %v736 = vsub.f32 %v620, 1.0
  %v737 = vsub.f32 %v622, 1.0
  %v738 = vsub.f32 %v624, 1.0
  %v739 = vsub.f32 %v626, 1.0
  %v740 = vsub.f32 %v628, 1.0
  %v741 = vsub.f32 %v630, 1.0
  %v742 = vsub.f32 %v632, 1.0
  %v743 = vsub.f32 %v634, 1.0
  %v744 = vsub.f32 %v636, 1.0
  %v745 = vsub.f32 %v638, 1.0
  %v746 = vsub.f32 %v640, 1.0
  %v747 = vsub.f32 %v642, 1.0
  %v748 = vsub.f32 %v644, 1.0
  %v749 = vsub.f32 %v646, 1.0
  %v750 = vsub.f32 %v648, 1.0
  %v751 = vsub.f32 %v650, 1.0
  %v752 = vsub.f32 %v652, 1.0
  %v753 = vsub.f32 %v654, 1.0
  %v754 = vsub.f32 %v656, 1.0
  %v755 = vsub.f32 %v658, 1.0
  %v756 = vsub.f32 %v660, 1.0
  %v757 = vsub.f32 %v662, 1.0
  %v758 = vsub.f32 %v664, 1.0
  %v759 = vsub.f32 %v666, 1.0
  %v760 = vsub.f32 %v668, 1.0
  %v761 = vsub.f32 %v670, 1.0
  %v762 = vsub.f32 %v672, 1.0
  %v763 = vsub.f32 %v674, 1.0
  %v764 = vsub.f32 %v676, 1.0
  %v765 = vsub.f32 %v678, 1.0
  %v766 = vsub.f32 %v680, 1.0
  %v767 = vsub.f32 %v682, 1.0
  %v768 = vsub.f32 %v684, 1.0
  %v769 = vsub.f32 %v686, 1.0
  %v770 = vsub.f32 %v688, 1.0
  %v771 = vsub.f32 %v690, 1.0
  %v772 = vsub.f32 %v692, 1.0
  %v773 = vsub.f32 %v694, 1.0
  %v774 = vsub.f32 %v696, 1.0
  %v775 = vsub.f32 %v698, 1.0
  %v776 = vsub.f32 %v700, 1.0
  %v777 = vsub.f32 %v702, 1.0
  %v778 = vsub.f32 %v704, 1.0
  %v779 = vsub.f32 %v706, 1.0
  %v780 = vsub.f32 %v708, 1.0
  %v781 = vsub.f32 %v710, 1.0
  %v782 = vsub.f32 %v712, 1.0
  %v783 = vsub.f32 %v714, 1.0
  %v784 = vsub.f32 %v716, 1.0
  %v785 = vsub.f32 %v718, 1.0
  %v786 = vsub.f32 %v720, 1.0
  %v787 = vsub.f32 %v722, 1.0
  %v788 = vsub.f32 %v724, 1.0
  %v789 = vmul.f32 %v725, 1.6732632
  %v790 = vmul.f32 %v726, 1.6732632
  %v791 = vmul.f32 %v727, 1.6732632
  %v792 = vmul.f32 %v728, 1.6732632
  %v793 = vmul.f32 %v729, 1.6732632
  %v794 = vmul.f32 %v730, 1.6732632
  %v795 = vmul.f32 %v731, 1.6732632
  %v796 = vmul.f32 %v732, 1.6732632
  %v797 = vmul.f32 %v733, 1.6732632
  %v798 = vmul.f32 %v734, 1.6732632
  %v799 = vmul.f32 %v735, 1.6732632
  %v800 = vmul.f32 %v736, 1.6732632
  %v801 = vmul.f32 %v737, 1.6732632
  %v802 = vmul.f32 %v738, 1.6732632
  %v803 = vmul.f32 %v739, 1.6732632
  %v804 = vmul.f32 %v740, 1.6732632
  %v805 = vmul.f32 %v741, 1.6732632
  %v806 = vmul.f32 %v742, 1.6732632
  %v807 = vmul.f32 %v743, 1.6732632
  %v808 = vmul.f32 %v744, 1.6732632
  %v809 = vmul.f32 %v745, 1.6732632
  %v810 = vmul.f32 %v746, 1.6732632
  %v811 = vmul.f32 %v747, 1.6732632
  %v812 = vmul.f32 %v748, 1.6732632
  %v813 = vmul.f32 %v749, 1.6732632
  %v814 = vmul.f32 %v750, 1.6732632
  %v815 = vmul.f32 %v751, 1.6732632
  %v816 = vmul.f32 %v752, 1.6732632
  %v817 = vmul.f32 %v753, 1.6732632
  %v818 = vmul.f32 %v754, 1.6732632
  %v819 = vmul.f32 %v755, 1.6732632
  %v820 = vmul.f32 %v756, 1.6732632
  %v821 = vmul.f32 %v757, 1.6732632
  %v822 = vmul.f32 %v758, 1.6732632
  %v823 = vmul.f32 %v759, 1.6732632
  %v824 = vmul.f32 %v760, 1.6732632
  %v825 = vmul.f32 %v761, 1.6732632
  %v826 = vmul.f32 %v762, 1.6732632
  %v827 = vmul.f32 %v763, 1.6732632
  %v828 = vmul.f32 %v764, 1.6732632
  %v829 = vmul.f32 %v765, 1.6732632
  %v830 = vmul.f32 %v766, 1.6732632
  %v831 = vmul.f32 %v767, 1.6732632
  %v832 = vmul.f32 %v768, 1.6732632
  %v833 = vmul.f32 %v769, 1.6732632
  %v834 = vmul.f32 %v770, 1.6732632
  %v835 = vmul.f32 %v771, 1.6732632
  %v836 = vmul.f32 %v772, 1.6732632
  %v837 = vmul.f32 %v773, 1.6732632
  %v838 = vmul.f32 %v774, 1.6732632
  %v839 = vmul.f32 %v775, 1.6732632
  %v840 = vmul.f32 %v776, 1.6732632
  %v841 = vmul.f32 %v777, 1.6732632
  %v842 = vmul.f32 %v778, 1.6732632
  %v843 = vmul.f32 %v779, 1.6732632
  %v844 = vmul.f32 %v780, 1.6732632
  %v845 = vmul.f32 %v781, 1.6732632
  %v846 = vmul.f32 %v782, 1.6732632
  %v847 = vmul.f32 %v783, 1.6732632
  %v848 = vmul.f32 %v784, 1.6732632
  %v849 = vmul.f32 %v785, 1.6732632
  %v850 = vmul.f32 %v786, 1.6732632
  %v851 = vmul.f32 %v787, 1.6732632
  %v852 = vmul.f32 %v788, 1.6732632
  %vm853 = vcmp.gt.f32.partialorder %v374, 0.0
  %vm854 = vcmp.gt.f32.partialorder %v376, 0.0
  %vm855 = vcmp.gt.f32.partialorder %v379, 0.0
  %vm856 = vcmp.gt.f32.partialorder %v381, 0.0
  %vm857 = vcmp.gt.f32.partialorder %v384, 0.0
  %vm858 = vcmp.gt.f32.partialorder %v386, 0.0
  %vm859 = vcmp.gt.f32.partialorder %v389, 0.0
  %vm860 = vcmp.gt.f32.partialorder %v391, 0.0
  %vm861 = vcmp.gt.f32.partialorder %v394, 0.0
  %vm862 = vcmp.gt.f32.partialorder %v396, 0.0
  %vm863 = vcmp.gt.f32.partialorder %v399, 0.0
  %vm864 = vcmp.gt.f32.partialorder %v401, 0.0
  %vm865 = vcmp.gt.f32.partialorder %v404, 0.0
  %vm866 = vcmp.gt.f32.partialorder %v406, 0.0
  %vm867 = vcmp.gt.f32.partialorder %v409, 0.0
  %vm868 = vcmp.gt.f32.partialorder %v411, 0.0
  %vm869 = vcmp.gt.f32.partialorder %v414, 0.0
  %vm870 = vcmp.gt.f32.partialorder %v416, 0.0
  %vm871 = vcmp.gt.f32.partialorder %v419, 0.0
  %vm872 = vcmp.gt.f32.partialorder %v421, 0.0
  %vm873 = vcmp.gt.f32.partialorder %v424, 0.0
  %vm874 = vcmp.gt.f32.partialorder %v426, 0.0
  %vm875 = vcmp.gt.f32.partialorder %v429, 0.0
  %vm876 = vcmp.gt.f32.partialorder %v431, 0.0
  %vm877 = vcmp.gt.f32.partialorder %v434, 0.0
  %vm878 = vcmp.gt.f32.partialorder %v436, 0.0
  %vm879 = vcmp.gt.f32.partialorder %v439, 0.0
  %vm880 = vcmp.gt.f32.partialorder %v441, 0.0
  %vm881 = vcmp.gt.f32.partialorder %v444, 0.0
  %vm882 = vcmp.gt.f32.partialorder %v446, 0.0
  %vm883 = vcmp.gt.f32.partialorder %v449, 0.0
  %vm884 = vcmp.gt.f32.partialorder %v451, 0.0
  %vm885 = vcmp.gt.f32.partialorder %v454, 0.0
  %vm886 = vcmp.gt.f32.partialorder %v456, 0.0
  %vm887 = vcmp.gt.f32.partialorder %v459, 0.0
  %vm888 = vcmp.gt.f32.partialorder %v461, 0.0
  %vm889 = vcmp.gt.f32.partialorder %v464, 0.0
  %vm890 = vcmp.gt.f32.partialorder %v466, 0.0
  %vm891 = vcmp.gt.f32.partialorder %v469, 0.0
  %vm892 = vcmp.gt.f32.partialorder %v471, 0.0
  %vm893 = vcmp.gt.f32.partialorder %v474, 0.0
  %vm894 = vcmp.gt.f32.partialorder %v476, 0.0
  %vm895 = vcmp.gt.f32.partialorder %v479, 0.0
  %vm896 = vcmp.gt.f32.partialorder %v481, 0.0
  %vm897 = vcmp.gt.f32.partialorder %v484, 0.0
  %vm898 = vcmp.gt.f32.partialorder %v486, 0.0
  %vm899 = vcmp.gt.f32.partialorder %v489, 0.0
  %vm900 = vcmp.gt.f32.partialorder %v491, 0.0
  %vm901 = vcmp.gt.f32.partialorder %v494, 0.0
  %vm902 = vcmp.gt.f32.partialorder %v496, 0.0
  %vm903 = vcmp.gt.f32.partialorder %v499, 0.0
  %vm904 = vcmp.gt.f32.partialorder %v501, 0.0
  %vm905 = vcmp.gt.f32.partialorder %v504, 0.0
  %vm906 = vcmp.gt.f32.partialorder %v506, 0.0
  %vm907 = vcmp.gt.f32.partialorder %v509, 0.0
  %vm908 = vcmp.gt.f32.partialorder %v511, 0.0
  %vm909 = vcmp.gt.f32.partialorder %v514, 0.0
  %vm910 = vcmp.gt.f32.partialorder %v516, 0.0
  %vm911 = vcmp.gt.f32.partialorder %v519, 0.0
  %vm912 = vcmp.gt.f32.partialorder %v521, 0.0
  %vm913 = vcmp.gt.f32.partialorder %v524, 0.0
  %vm914 = vcmp.gt.f32.partialorder %v526, 0.0
  %vm915 = vcmp.gt.f32.partialorder %v529, 0.0
  %vm916 = vcmp.gt.f32.partialorder %v531, 0.0
  %v917 = vsel %vm853, %v374, %v789
  %v918 = vsel %vm854, %v376, %v790
  %v919 = vsel %vm855, %v379, %v791
  %v920 = vsel %vm856, %v381, %v792
  %v921 = vsel %vm857, %v384, %v793
  %v922 = vsel %vm858, %v386, %v794
  %v923 = vsel %vm859, %v389, %v795
  %v924 = vsel %vm860, %v391, %v796
  %v925 = vsel %vm861, %v394, %v797
  %v926 = vsel %vm862, %v396, %v798
  %v927 = vsel %vm863, %v399, %v799
  %v928 = vsel %vm864, %v401, %v800
  %v929 = vsel %vm865, %v404, %v801
  %v930 = vsel %vm866, %v406, %v802
  %v931 = vsel %vm867, %v409, %v803
  %v932 = vsel %vm868, %v411, %v804
  %v933 = vsel %vm869, %v414, %v805
  %v934 = vsel %vm870, %v416, %v806
  %v935 = vsel %vm871, %v419, %v807
  %v936 = vsel %vm872, %v421, %v808
  %v937 = vsel %vm873, %v424, %v809
  %v938 = vsel %vm874, %v426, %v810
  %v939 = vsel %vm875, %v429, %v811
  %v940 = vsel %vm876, %v431, %v812
  %v941 = vsel %vm877, %v434, %v813
  %v942 = vsel %vm878, %v436, %v814
  %v943 = vsel %vm879, %v439, %v815
  %v944 = vsel %vm880, %v441, %v816
  %v945 = vsel %vm881, %v444, %v817
  %v946 = vsel %vm882, %v446, %v818
  %v947 = vsel %vm883, %v449, %v819
  %v948 = vsel %vm884, %v451, %v820
  %v949 = vsel %vm885, %v454, %v821
  %v950 = vsel %vm886, %v456, %v822
  %v951 = vsel %vm887, %v459, %v823
  %v952 = vsel %vm888, %v461, %v824
  %v953 = vsel %vm889, %v464, %v825
  %v954 = vsel %vm890, %v466, %v826
  %v955 = vsel %vm891, %v469, %v827
  %v956 = vsel %vm892, %v471, %v828
  %v957 = vsel %vm893, %v474, %v829
  %v958 = vsel %vm894, %v476, %v830
  %v959 = vsel %vm895, %v479, %v831
  %v960 = vsel %vm896, %v481, %v832
  %v961 = vsel %vm897, %v484, %v833
  %v962 = vsel %vm898, %v486, %v834
  %v963 = vsel %vm899, %v489, %v835
  %v964 = vsel %vm900, %v491, %v836
  %v965 = vsel %vm901, %v494, %v837
  %v966 = vsel %vm902, %v496, %v838
  %v967 = vsel %vm903, %v499, %v839
  %v968 = vsel %vm904, %v501, %v840
  %v969 = vsel %vm905, %v504, %v841
  %v970 = vsel %vm906, %v506, %v842
  %v971 = vsel %vm907, %v509, %v843
  %v972 = vsel %vm908, %v511, %v844
  %v973 = vsel %vm909, %v514, %v845
  %v974 = vsel %vm910, %v516, %v846
  %v975 = vsel %vm911, %v519, %v847
  %v976 = vsel %vm912, %v521, %v848
  %v977 = vsel %vm913, %v524, %v849
  %v978 = vsel %vm914, %v526, %v850
  %v979 = vsel %vm915, %v529, %v851
  %v980 = vsel %vm916, %v531, %v852
  %v981 = vmul.f32 %v917, 1.050701
  %v982 = vmul.f32 %v918, 1.050701
  %v983 = vmul.f32 %v919, 1.050701
  %v984 = vmul.f32 %v920, 1.050701
  %v985 = vmul.f32 %v921, 1.050701
  %v986 = vmul.f32 %v922, 1.050701
  %v987 = vmul.f32 %v923, 1.050701
  %v988 = vmul.f32 %v924, 1.050701
  %v989 = vmul.f32 %v925, 1.050701
  %v990 = vmul.f32 %v926, 1.050701
  %v991 = vmul.f32 %v927, 1.050701
  %v992 = vmul.f32 %v928, 1.050701
  %v993 = vmul.f32 %v929, 1.050701
  %v994 = vmul.f32 %v930, 1.050701
  %v995 = vmul.f32 %v931, 1.050701
  %v996 = vmul.f32 %v932, 1.050701
  %v997 = vmul.f32 %v933, 1.050701
  %v998 = vmul.f32 %v934, 1.050701
  %v999 = vmul.f32 %v935, 1.050701
  %v1000 = vmul.f32 %v936, 1.050701
  %v1001 = vmul.f32 %v937, 1.050701
  %v1002 = vmul.f32 %v938, 1.050701
  %v1003 = vmul.f32 %v939, 1.050701
  %v1004 = vmul.f32 %v940, 1.050701
  %v1005 = vmul.f32 %v941, 1.050701
  %v1006 = vmul.f32 %v942, 1.050701
  %v1007 = vmul.f32 %v943, 1.050701
  %v1008 = vmul.f32 %v944, 1.050701
  %v1009 = vmul.f32 %v945, 1.050701
  %v1010 = vmul.f32 %v946, 1.050701
  %v1011 = vmul.f32 %v947, 1.050701
  %v1012 = vmul.f32 %v948, 1.050701
  %v1013 = vmul.f32 %v949, 1.050701
  %v1014 = vmul.f32 %v950, 1.050701
  %v1015 = vmul.f32 %v951, 1.050701
  %v1016 = vmul.f32 %v952, 1.050701
  %v1017 = vmul.f32 %v953, 1.050701
  %v1018 = vmul.f32 %v954, 1.050701
  %v1019 = vmul.f32 %v955, 1.050701
  %v1020 = vmul.f32 %v956, 1.050701
  %v1021 = vmul.f32 %v957, 1.050701
  %v1022 = vmul.f32 %v958, 1.050701
  %v1023 = vmul.f32 %v959, 1.050701
  %v1024 = vmul.f32 %v960, 1.050701
  %v1025 = vmul.f32 %v961, 1.050701
  %v1026 = vmul.f32 %v962, 1.050701
  %v1027 = vmul.f32 %v963, 1.050701
  %v1028 = vmul.f32 %v964, 1.050701
  %v1029 = vmul.f32 %v965, 1.050701
  %v1030 = vmul.f32 %v966, 1.050701
  %v1031 = vmul.f32 %v967, 1.050701
  %v1032 = vmul.f32 %v968, 1.050701
  %v1033 = vmul.f32 %v969, 1.050701
  %v1034 = vmul.f32 %v970, 1.050701
  %v1035 = vmul.f32 %v971, 1.050701
  %v1036 = vmul.f32 %v972, 1.050701
  %v1037 = vmul.f32 %v973, 1.050701
  %v1038 = vmul.f32 %v974, 1.050701
  %v1039 = vmul.f32 %v975, 1.050701
  %v1040 = vmul.f32 %v976, 1.050701
  %v1041 = vmul.f32 %v977, 1.050701
  %v1042 = vmul.f32 %v978, 1.050701
  %v1043 = vmul.f32 %v979, 1.050701
  %v1044 = vmul.f32 %v980, 1.050701
  %v1045 = vpack.c.bf16 %v981, %v981
  %v1046 = vpack.c.bf16 %v982, %v982
  %v1047 = vpack.c.bf16 %v983, %v983
  %v1048 = vpack.c.bf16 %v984, %v984
  %v1049 = vpack.c.bf16 %v985, %v985
  %v1050 = vpack.c.bf16 %v986, %v986
  %v1051 = vpack.c.bf16 %v987, %v987
  %v1052 = vpack.c.bf16 %v988, %v988
  %v1053 = vpack.c.bf16 %v989, %v989
  %v1054 = vpack.c.bf16 %v990, %v990
  %v1055 = vpack.c.bf16 %v991, %v991
  %v1056 = vpack.c.bf16 %v992, %v992
  %v1057 = vpack.c.bf16 %v993, %v993
  %v1058 = vpack.c.bf16 %v994, %v994
  %v1059 = vpack.c.bf16 %v995, %v995
  %v1060 = vpack.c.bf16 %v996, %v996
  %v1061 = vpack.c.bf16 %v997, %v997
  %v1062 = vpack.c.bf16 %v998, %v998
  %v1063 = vpack.c.bf16 %v999, %v999
  %v1064 = vpack.c.bf16 %v1000, %v1000
  %v1065 = vpack.c.bf16 %v1001, %v1001
  %v1066 = vpack.c.bf16 %v1002, %v1002
  %v1067 = vpack.c.bf16 %v1003, %v1003
  %v1068 = vpack.c.bf16 %v1004, %v1004
  %v1069 = vpack.c.bf16 %v1005, %v1005
  %v1070 = vpack.c.bf16 %v1006, %v1006
  %v1071 = vpack.c.bf16 %v1007, %v1007
  %v1072 = vpack.c.bf16 %v1008, %v1008
  %v1073 = vpack.c.bf16 %v1009, %v1009
  %v1074 = vpack.c.bf16 %v1010, %v1010
  %v1075 = vpack.c.bf16 %v1011, %v1011
  %v1076 = vpack.c.bf16 %v1012, %v1012
  %v1077 = vpack.c.bf16 %v1013, %v1013
  %v1078 = vpack.c.bf16 %v1014, %v1014
  %v1079 = vpack.c.bf16 %v1015, %v1015
  %v1080 = vpack.c.bf16 %v1016, %v1016
  %v1081 = vpack.c.bf16 %v1017, %v1017
  %v1082 = vpack.c.bf16 %v1018, %v1018
  %v1083 = vpack.c.bf16 %v1019, %v1019
  %v1084 = vpack.c.bf16 %v1020, %v1020
  %v1085 = vpack.c.bf16 %v1021, %v1021
  %v1086 = vpack.c.bf16 %v1022, %v1022
  %v1087 = vpack.c.bf16 %v1023, %v1023
  %v1088 = vpack.c.bf16 %v1024, %v1024
  %v1089 = vpack.c.bf16 %v1025, %v1025
  %v1090 = vpack.c.bf16 %v1026, %v1026
  %v1091 = vpack.c.bf16 %v1027, %v1027
  %v1092 = vpack.c.bf16 %v1028, %v1028
  %v1093 = vpack.c.bf16 %v1029, %v1029
  %v1094 = vpack.c.bf16 %v1030, %v1030
  %v1095 = vpack.c.bf16 %v1031, %v1031
  %v1096 = vpack.c.bf16 %v1032, %v1032
  %v1097 = vpack.c.bf16 %v1033, %v1033
  %v1098 = vpack.c.bf16 %v1034, %v1034
  %v1099 = vpack.c.bf16 %v1035, %v1035
  %v1100 = vpack.c.bf16 %v1036, %v1036
  %v1101 = vpack.c.bf16 %v1037, %v1037
  %v1102 = vpack.c.bf16 %v1038, %v1038
  %v1103 = vpack.c.bf16 %v1039, %v1039
  %v1104 = vpack.c.bf16 %v1040, %v1040
  %v1105 = vpack.c.bf16 %v1041, %v1041
  %v1106 = vpack.c.bf16 %v1042, %v1042
  %v1107 = vpack.c.bf16 %v1043, %v1043
  %v1108 = vpack.c.bf16 %v1044, %v1044
  %vm1109 = vcmask 257024
  %1110 = vst.msk [vmem:[%s3] sm:$0xf] %vm1109, %v1045
  %1111 = vst.msk [vmem:[%s3 + $0x4] sm:$0xf] %vm1109, %v1046
  %1112 = vst.msk [vmem:[%s3 + $0x8] sm:$0xf] %vm1109, %v1047
  %1113 = vst.msk [vmem:[%s3 + $0xc] sm:$0xf] %vm1109, %v1048
  %1114 = vst.msk [vmem:[%s3 + $0x10] sm:$0xf] %vm1109, %v1049
  %1115 = vst.msk [vmem:[%s3 + $0x14] sm:$0xf] %vm1109, %v1050
  %1116 = vst.msk [vmem:[%s3 + $0x18] sm:$0xf] %vm1109, %v1051
  %1117 = vst.msk [vmem:[%s3 + $0x1c] sm:$0xf] %vm1109, %v1052
  %1118 = vst.msk [vmem:[%s3 + $0x20] sm:$0xf] %vm1109, %v1053
  %1119 = vst.msk [vmem:[%s3 + $0x24] sm:$0xf] %vm1109, %v1054
  %1120 = vst.msk [vmem:[%s3 + $0x28] sm:$0xf] %vm1109, %v1055
  %1121 = vst.msk [vmem:[%s3 + $0x2c] sm:$0xf] %vm1109, %v1056
  %1122 = vst.msk [vmem:[%s3 + $0x30] sm:$0xf] %vm1109, %v1057
  %1123 = vst.msk [vmem:[%s3 + $0x34] sm:$0xf] %vm1109, %v1058
  %1124 = vst.msk [vmem:[%s3 + $0x38] sm:$0xf] %vm1109, %v1059
  %1125 = vst.msk [vmem:[%s3 + $0x3c] sm:$0xf] %vm1109, %v1060
  %1126 = vst.msk [vmem:[%s3 + $0x40] sm:$0xf] %vm1109, %v1061
  %1127 = vst.msk [vmem:[%s3 + $0x44] sm:$0xf] %vm1109, %v1062
  %1128 = vst.msk [vmem:[%s3 + $0x48] sm:$0xf] %vm1109, %v1063
  %1129 = vst.msk [vmem:[%s3 + $0x4c] sm:$0xf] %vm1109, %v1064
  %1130 = vst.msk [vmem:[%s3 + $0x50] sm:$0xf] %vm1109, %v1065
  %1131 = vst.msk [vmem:[%s3 + $0x54] sm:$0xf] %vm1109, %v1066
  %1132 = vst.msk [vmem:[%s3 + $0x58] sm:$0xf] %vm1109, %v1067
  %1133 = vst.msk [vmem:[%s3 + $0x5c] sm:$0xf] %vm1109, %v1068
  %1134 = vst.msk [vmem:[%s3 + $0x60] sm:$0xf] %vm1109, %v1069
  %1135 = vst.msk [vmem:[%s3 + $0x64] sm:$0xf] %vm1109, %v1070
  %1136 = vst.msk [vmem:[%s3 + $0x68] sm:$0xf] %vm1109, %v1071
  %1137 = vst.msk [vmem:[%s3 + $0x6c] sm:$0xf] %vm1109, %v1072
  %1138 = vst.msk [vmem:[%s3 + $0x70] sm:$0xf] %vm1109, %v1073
  %1139 = vst.msk [vmem:[%s3 + $0x74] sm:$0xf] %vm1109, %v1074
  %1140 = vst.msk [vmem:[%s3 + $0x78] sm:$0xf] %vm1109, %v1075
  %1141 = vst.msk [vmem:[%s3 + $0x7c] sm:$0xf] %vm1109, %v1076
  %1142 = vst.msk [vmem:[%s3 + $0x80] sm:$0xf] %vm1109, %v1077
  %1143 = vst.msk [vmem:[%s3 + $0x84] sm:$0xf] %vm1109, %v1078
  %1144 = vst.msk [vmem:[%s3 + $0x88] sm:$0xf] %vm1109, %v1079
  %1145 = vst.msk [vmem:[%s3 + $0x8c] sm:$0xf] %vm1109, %v1080
  %1146 = vst.msk [vmem:[%s3 + $0x90] sm:$0xf] %vm1109, %v1081
  %1147 = vst.msk [vmem:[%s3 + $0x94] sm:$0xf] %vm1109, %v1082
  %1148 = vst.msk [vmem:[%s3 + $0x98] sm:$0xf] %vm1109, %v1083
  %1149 = vst.msk [vmem:[%s3 + $0x9c] sm:$0xf] %vm1109, %v1084
  %1150 = vst.msk [vmem:[%s3 + $0xa0] sm:$0xf] %vm1109, %v1085
  %1151 = vst.msk [vmem:[%s3 + $0xa4] sm:$0xf] %vm1109, %v1086
  %1152 = vst.msk [vmem:[%s3 + $0xa8] sm:$0xf] %vm1109, %v1087
  %1153 = vst.msk [vmem:[%s3 + $0xac] sm:$0xf] %vm1109, %v1088
  %1154 = vst.msk [vmem:[%s3 + $0xb0] sm:$0xf] %vm1109, %v1089
  %1155 = vst.msk [vmem:[%s3 + $0xb4] sm:$0xf] %vm1109, %v1090
  %1156 = vst.msk [vmem:[%s3 + $0xb8] sm:$0xf] %vm1109, %v1091
  %1157 = vst.msk [vmem:[%s3 + $0xbc] sm:$0xf] %vm1109, %v1092
  %1158 = vst.msk [vmem:[%s3 + $0xc0] sm:$0xf] %vm1109, %v1093
  %1159 = vst.msk [vmem:[%s3 + $0xc4] sm:$0xf] %vm1109, %v1094
  %1160 = vst.msk [vmem:[%s3 + $0xc8] sm:$0xf] %vm1109, %v1095
  %1161 = vst.msk [vmem:[%s3 + $0xcc] sm:$0xf] %vm1109, %v1096
  %1162 = vst.msk [vmem:[%s3 + $0xd0] sm:$0xf] %vm1109, %v1097
  %1163 = vst.msk [vmem:[%s3 + $0xd4] sm:$0xf] %vm1109, %v1098
  %1164 = vst.msk [vmem:[%s3 + $0xd8] sm:$0xf] %vm1109, %v1099
  %1165 = vst.msk [vmem:[%s3 + $0xdc] sm:$0xf] %vm1109, %v1100
  %1166 = vst.msk [vmem:[%s3 + $0xe0] sm:$0xf] %vm1109, %v1101
  %1167 = vst.msk [vmem:[%s3 + $0xe4] sm:$0xf] %vm1109, %v1102
  %1168 = vst.msk [vmem:[%s3 + $0xe8] sm:$0xf] %vm1109, %v1103
  %1169 = vst.msk [vmem:[%s3 + $0xec] sm:$0xf] %vm1109, %v1104
  %1170 = vst.msk [vmem:[%s3 + $0xf0] sm:$0xf] %vm1109, %v1105
  %1171 = vst.msk [vmem:[%s3 + $0xf4] sm:$0xf] %vm1109, %v1106
  %1172 = vst.msk [vmem:[%s3 + $0xf8] sm:$0xf] %vm1109, %v1107
  %1173 = vst.msk [vmem:[%s3 + $0xfc] sm:$0xf] %vm1109, %v1108
  // Predicated region
  $region14: #{cnn_encoder.2} parent=0 // pred_check
    _
  $region15: #{cnn_encoder.2} parent=0 // pred_check_branch
    %1175 = sbr.rel (0) target = $region17
  $region16: #{cnn_encoder.2} parent=0 // pred_region
    _
  $region17: #{cnn_encoder.2} parent=0 // pred_fallthru
    _
  // Predicated region
  $region18: #{cnn_encoder.2} parent=0 // pred_check
    _
  $region19: #{cnn_encoder.2} parent=0 // pred_check_branch
    %1177 = sbr.rel (0) target = $region21
  $region20: #{cnn_encoder.2} parent=0 // pred_region
    _
  $region21: #{cnn_encoder.2} parent=0 // pred_fallthru
    _

// kernel: cnn_encoder.3
$region0: #{cnn_encoder.3}
  #allocation0 [shape = 'u32[]', space=smem, size = 0x4, offset = 0x4, fixed_abs, tag = 'smem constant byte address 0x4 - core index']
  #allocation1 [shape = 'u32[72,128]{1,0:T(1,128)}', space=vmem, size = 0x9000, scoped, tag = 'internal scratch']
  %s0 = inlined_call_operand.vmem [shape: bf16[128,288], index: 0, kind: input, shape index: {}]
  %s1 = inlined_call_operand.vmem [shape: bf16[288,64], index: 1, kind: input, shape index: {}]
  %s2 = inlined_call_operand.vmem [shape: f32[1,64], index: 2, kind: input, shape index: {}]
  %s3 = inlined_call_operand.vmem [shape: bf16[4,64,128], index: 3, kind: input, shape index: {}]
  %s4 = inlined_call_operand.vmem [shape: f32[1,128], index: 4, kind: input, shape index: {}]
  %s5 = inlined_call_operand.vmem [shape: bf16[4,128,256], index: 5, kind: input, shape index: {}]
  %s6 = inlined_call_operand.vmem [shape: f32[1,256], index: 6, kind: input, shape index: {}]
  %s7 = inlined_call_operand.vmem [shape: bf16[128,64], index: 7, kind: output, shape index: {0}]
  %s8 = inlined_call_operand.vmem [shape: bf16[32,128], index: 8, kind: output, shape index: {1}]
  %s9 = inlined_call_operand.vmem [shape: bf16[8,256], index: 9, kind: output, shape index: {2}]
  %10 = xla_tuple %s7, %s8, %s9
  %s11 = sld [smem:[#allocation0]]
  $region54: #{cnn_encoder.3} parent=0
    _
  %s13 = ssub.s32 1, %s11
  %s14 = scalar_select 0, %s13, %s11
  // Predicated region
  $region2: #{cnn_encoder.3} parent=0 // pred_check
    _
  $region3: #{cnn_encoder.3} parent=0 // pred_check_branch
    %16 = sbr.rel (0) target = $region5
  $region4: #{cnn_encoder.3} parent=0 // pred_region
    _
  $region5: #{cnn_encoder.3} parent=0 // pred_fallthru
    _
  // Predicated region
  $region6: #{cnn_encoder.3} parent=0 // pred_check
    _
  $region7: #{cnn_encoder.3} parent=0 // pred_check_branch
    %18 = sbr.rel (0) target = $region9
  $region8: #{cnn_encoder.3} parent=0 // pred_region
    _
  $region9: #{cnn_encoder.3} parent=0 // pred_fallthru
    _
  // Predicated region
  $region10: #{cnn_encoder.3} parent=0 // pred_check
    _
  $region11: #{cnn_encoder.3} parent=0 // pred_check_branch
    %20 = sbr.rel (0) target = $region13
  $region12: #{cnn_encoder.3} parent=0 // pred_region
    _
  $region13: #{cnn_encoder.3} parent=0 // pred_fallthru
    _
  // Predicated region
  $region14: #{cnn_encoder.3} parent=0 // pred_check
    _
  $region15: #{cnn_encoder.3} parent=0 // pred_check_branch
    %22 = sbr.rel (0) target = $region17
  $region16: #{cnn_encoder.3} parent=0 // pred_region
    _
  $region17: #{cnn_encoder.3} parent=0 // pred_fallthru
    _
  // Predicated region
  $region18: #{cnn_encoder.3} parent=0 // pred_check
    _
  $region19: #{cnn_encoder.3} parent=0 // pred_check_branch
    %24 = sbr.rel (0) target = $region21
  $region20: #{cnn_encoder.3} parent=0 // pred_region
    _
  $region21: #{cnn_encoder.3} parent=0 // pred_fallthru
    _
  // Predicated region
  $region22: #{cnn_encoder.3} parent=0 // pred_check
    _
  $region23: #{cnn_encoder.3} parent=0 // pred_check_branch
    %26 = sbr.rel (0) target = $region25
  $region24: #{cnn_encoder.3} parent=0 // pred_region
    _
  $region25: #{cnn_encoder.3} parent=0 // pred_fallthru
    _
  // Predicated region
  $region26: #{cnn_encoder.3} parent=0 // pred_check
    _
  $region27: #{cnn_encoder.3} parent=0 // pred_check_branch
    %28 = sbr.rel (0) target = $region29
  $region28: #{cnn_encoder.3} parent=0 // pred_region
    _
  $region29: #{cnn_encoder.3} parent=0 // pred_fallthru
    _
  %v30 = vld [vmem:[%s0] sm:$0xff]
  %v31 = vld [vmem:[%s0 + $0x8] sm:$0xf]
  %v32 = vld [vmem:[%s0 + $0xc] sm:$0xff]
  %v33 = vld [vmem:[%s0 + $0x14] sm:$0xf]
  %v34 = vld [vmem:[%s0 + $0x18] sm:$0xff]
  %v35 = vld [vmem:[%s0 + $0x20] sm:$0xf]
  %v36 = vld [vmem:[%s0 + $0x24] sm:$0xff]
  %v37 = vld [vmem:[%s0 + $0x2c] sm:$0xf]
  %v38 = vld [vmem:[%s0 + $0x30] sm:$0xff]
  %v39 = vld [vmem:[%s0 + $0x38] sm:$0xf]
  %v40 = vld [vmem:[%s0 + $0x3c] sm:$0xff]
  %v41 = vld [vmem:[%s0 + $0x44] sm:$0xf]
  %v42 = vld [vmem:[%s0 + $0x48] sm:$0xff]
  %v43 = vld [vmem:[%s0 + $0x50] sm:$0xf]
  %v44 = vld [vmem:[%s0 + $0x54] sm:$0xff]
  %v45 = vld [vmem:[%s0 + $0x5c] sm:$0xf]
  %v46 = vld [vmem:[%s0 + $0x60] sm:$0xff]
  %v47 = vld [vmem:[%s0 + $0x68] sm:$0xf]
  %v48 = vld [vmem:[%s0 + $0x6c] sm:$0xff]
  %v49 = vld [vmem:[%s0 + $0x74] sm:$0xf]
  %v50 = vld [vmem:[%s0 + $0x78] sm:$0xff]
  %v51 = vld [vmem:[%s0 + $0x80] sm:$0xf]
  %v52 = vld [vmem:[%s0 + $0x84] sm:$0xff]
  %v53 = vld [vmem:[%s0 + $0x8c] sm:$0xf]
  %v54 = vld [vmem:[%s0 + $0x90] sm:$0xff]
  %v55 = vld [vmem:[%s0 + $0x98] sm:$0xf]
  %v56 = vld [vmem:[%s0 + $0x9c] sm:$0xff]
  %v57 = vld [vmem:[%s0 + $0xa4] sm:$0xf]
  %v58 = vld [vmem:[%s0 + $0xa8] sm:$0xff]
  %v59 = vld [vmem:[%s0 + $0xb0] sm:$0xf]
  %v60 = vld [vmem:[%s0 + $0xb4] sm:$0xff]
  %v61 = vld [vmem:[%s0 + $0xbc] sm:$0xf]
  %v62 = vld [vmem:[%s1] sm:$0xf]
  %v63 = vld [vmem:[%s1 + $0x4] sm:$0xf]
  %v64 = vld [vmem:[%s1 + $0x8] sm:$0xf]
  %v65 = vld [vmem:[%s1 + $0xc] sm:$0xf]
  %v66 = vld [vmem:[%s1 + $0x10] sm:$0xf]
  %v67 = vld [vmem:[%s1 + $0x14] sm:$0xf]
  %v68 = vld [vmem:[%s1 + $0x18] sm:$0xf]
  %v69 = vld [vmem:[%s1 + $0x1c] sm:$0xf]
  %v70 = vld [vmem:[%s1 + $0x20] sm:$0xf]
  %v71 = vld [vmem:[%s1 + $0x24] sm:$0xf]
  %v72 = vld [vmem:[%s1 + $0x28] sm:$0xf]
  %v73 = vld [vmem:[%s1 + $0x2c] sm:$0xf]
  %v74 = vld [vmem:[%s1 + $0x30] sm:$0xf]
  %v75 = vld [vmem:[%s1 + $0x34] sm:$0xf]
  %v76 = vld [vmem:[%s1 + $0x38] sm:$0xf]
  %v77 = vld [vmem:[%s1 + $0x3c] sm:$0xf]
  %v78 = vld [vmem:[%s1 + $0x40] sm:$0xf]
  %v79 = vld [vmem:[%s1 + $0x44] sm:$0xf]
  %v80 = vld [vmem:[%s1 + $0x48] sm:$0xf]
  %v81 = vld [vmem:[%s1 + $0x4c] sm:$0xf]
  %v82 = vld [vmem:[%s1 + $0x50] sm:$0xf]
  %v83 = vld [vmem:[%s1 + $0x54] sm:$0xf]
  %v84 = vld [vmem:[%s1 + $0x58] sm:$0xf]
  %v85 = vld [vmem:[%s1 + $0x5c] sm:$0xf]
  %v86 = vld [vmem:[%s1 + $0x60] sm:$0xf]
  %v87 = vld [vmem:[%s1 + $0x64] sm:$0xf]
  %v88 = vld [vmem:[%s1 + $0x68] sm:$0xf]
  %v89 = vld [vmem:[%s1 + $0x6c] sm:$0xf]
  %v90 = vld [vmem:[%s1 + $0x70] sm:$0xf]
  %v91 = vld [vmem:[%s1 + $0x74] sm:$0xf]
  %v92 = vld [vmem:[%s1 + $0x78] sm:$0xf]
  %v93 = vld [vmem:[%s1 + $0x7c] sm:$0xf]
  %v94 = vld [vmem:[%s1 + $0x80] sm:$0xf]
  %v95 = vld [vmem:[%s1 + $0x84] sm:$0xf]
  %v96 = vld [vmem:[%s1 + $0x88] sm:$0xf]
  %v97 = vld [vmem:[%s1 + $0x8c] sm:$0xf]
  %v98 = vld [vmem:[%s2] sm:$0x1]
  %v100 = vperm.slane %v98, 0
  %v134 = vunpack.c.l.b16 %v30
  %v135 = vunpack.c.h.b16 %v30
  %v136 = vunpack.c.l.b16 %v31
  %v137 = vunpack.c.l.b16 %v32
  %v138 = vunpack.c.h.b16 %v32
  %v139 = vunpack.c.l.b16 %v33
  %v140 = vunpack.c.l.b16 %v34
  %v141 = vunpack.c.h.b16 %v34
  %v142 = vunpack.c.l.b16 %v35
  %v143 = vunpack.c.l.b16 %v36
  %v144 = vunpack.c.h.b16 %v36
  %v145 = vunpack.c.l.b16 %v37
  %v146 = vunpack.c.l.b16 %v38
  %v147 = vunpack.c.h.b16 %v38
  %v148 = vunpack.c.l.b16 %v39
  %v149 = vunpack.c.l.b16 %v40
  %v150 = vunpack.c.h.b16 %v40
  %v151 = vunpack.c.l.b16 %v41
  %v152 = vunpack.c.l.b16 %v42
  %v153 = vunpack.c.h.b16 %v42
  %v154 = vunpack.c.l.b16 %v43
  %v155 = vunpack.c.l.b16 %v44
  %v156 = vunpack.c.h.b16 %v44
  %v157 = vunpack.c.l.b16 %v45
  %v158 = vunpack.c.l.b16 %v46
  %v159 = vunpack.c.h.b16 %v46
  %v160 = vunpack.c.l.b16 %v47
  %v161 = vunpack.c.l.b16 %v48
  %v162 = vunpack.c.h.b16 %v48
  %v163 = vunpack.c.l.b16 %v49
  %v164 = vunpack.c.l.b16 %v50
  %v165 = vunpack.c.h.b16 %v50
  %v166 = vunpack.c.l.b16 %v51
  %v167 = vunpack.c.l.b16 %v52
  %v168 = vunpack.c.h.b16 %v52
  %v169 = vunpack.c.l.b16 %v53
  %v170 = vunpack.c.l.b16 %v54
  %v171 = vunpack.c.h.b16 %v54
  %v172 = vunpack.c.l.b16 %v55
  %v173 = vunpack.c.l.b16 %v56
  %v174 = vunpack.c.h.b16 %v56
  %v175 = vunpack.c.l.b16 %v57
  %v176 = vunpack.c.l.b16 %v58
  %v177 = vunpack.c.h.b16 %v58
  %v178 = vunpack.c.l.b16 %v59
  %v179 = vunpack.c.l.b16 %v60
  %v180 = vunpack.c.h.b16 %v60
  %v181 = vunpack.c.l.b16 %v61
  %v182 = vpack.c.b16 %v137, %v134
  %v183 = vpack.c.b16 %v138, %v135
  %v184 = vpack.c.b16 %v139, %v136
  %v185 = vpack.c.b16 %v143, %v140
  %v186 = vpack.c.b16 %v144, %v141
  %v187 = vpack.c.b16 %v145, %v142
  %v188 = vpack.c.b16 %v149, %v146
  %v189 = vpack.c.b16 %v150, %v147
  %v190 = vpack.c.b16 %v151, %v148
  %v191 = vpack.c.b16 %v155, %v152
  %v192 = vpack.c.b16 %v156, %v153
  %v193 = vpack.c.b16 %v157, %v154
  %v194 = vpack.c.b16 %v161, %v158
  %v195 = vpack.c.b16 %v162, %v159
  %v196 = vpack.c.b16 %v163, %v160
  %v197 = vpack.c.b16 %v167, %v164
  %v198 = vpack.c.b16 %v168, %v165
  %v199 = vpack.c.b16 %v169, %v166
  %v200 = vpack.c.b16 %v173, %v170
  %v201 = vpack.c.b16 %v174, %v171
  %v202 = vpack.c.b16 %v175, %v172
  %v203 = vpack.c.b16 %v179, %v176
  %v204 = vpack.c.b16 %v180, %v177
  %v205 = vpack.c.b16 %v181, %v178
  %v258 = vunpack.c.l.b16 %v62
  %v259 = vunpack.c.l.b16 %v63
  %v260 = vunpack.c.l.b16 %v64
  %v261 = vunpack.c.l.b16 %v65
  %v262 = vunpack.c.l.b16 %v66
  %v263 = vunpack.c.l.b16 %v67
  %v264 = vunpack.c.l.b16 %v68
  %v265 = vunpack.c.l.b16 %v69
  %v266 = vunpack.c.l.b16 %v70
  %v267 = vunpack.c.l.b16 %v71
  %v268 = vunpack.c.l.b16 %v72
  %v269 = vunpack.c.l.b16 %v73
  %v270 = vunpack.c.l.b16 %v74
  %v271 = vunpack.c.l.b16 %v75
  %v272 = vunpack.c.l.b16 %v76
  %v273 = vunpack.c.l.b16 %v77
  %v274 = vunpack.c.l.b16 %v78
  %v275 = vunpack.c.l.b16 %v79
  %v276 = vunpack.c.l.b16 %v80
  %v277 = vunpack.c.l.b16 %v81
  %v278 = vunpack.c.l.b16 %v82
  %v279 = vunpack.c.l.b16 %v83
  %v280 = vunpack.c.l.b16 %v84
  %v281 = vunpack.c.l.b16 %v85
  %v282 = vunpack.c.l.b16 %v86
  %v283 = vunpack.c.l.b16 %v87
  %v284 = vunpack.c.l.b16 %v88
  %v285 = vunpack.c.l.b16 %v89
  %v286 = vunpack.c.l.b16 %v90
  %v287 = vunpack.c.l.b16 %v91
  %v288 = vunpack.c.l.b16 %v92
  %v289 = vunpack.c.l.b16 %v93
  %v290 = vunpack.c.l.b16 %v94
  %v291 = vunpack.c.l.b16 %v95
  %v292 = vunpack.c.l.b16 %v96
  %v293 = vunpack.c.l.b16 %v97
  %v294 = vpack.c.b16 %v259, %v258
  %v295 = vpack.c.b16 %v261, %v260
  %v296 = vpack.c.b16 %v263, %v262
  %v297 = vpack.c.b16 %v265, %v264
  %v298 = vpack.c.b16 %v267, %v266
  %v299 = vpack.c.b16 %v269, %v268
  %v300 = vpack.c.b16 %v271, %v270
  %v301 = vpack.c.b16 %v273, %v272
  %v302 = vpack.c.b16 %v275, %v274
  %v303 = vpack.c.b16 %v277, %v276
  %v304 = vpack.c.b16 %v279, %v278
  %v305 = vpack.c.b16 %v281, %v280
  %v306 = vpack.c.b16 %v283, %v282
  %v307 = vpack.c.b16 %v285, %v284
  %v308 = vpack.c.b16 %v287, %v286
  %v309 = vpack.c.b16 %v289, %v288
  %v310 = vpack.c.b16 %v291, %v290
  %v311 = vpack.c.b16 %v293, %v292
  %vm330 = vcmask 261120
  %v332 = vsel %vm330, %v184, 0
  %v335 = vsel %vm330, %v187, 0
  %v338 = vsel %vm330, %v190, 0
  %v341 = vsel %vm330, %v193, 0
  %v344 = vsel %vm330, %v196, 0
  %v347 = vsel %vm330, %v199, 0
  %v350 = vsel %vm330, %v202, 0
  %v353 = vsel %vm330, %v205, 0
  %355 = vmatpush.bf16.msra.mxu0 %v301
  %356 = vmatpush.bf16.msra.mxu0 %v300
  %357 = vmatpush.bf16.msra.mxu0 %v299
  %358 = vmatpush.bf16.msra.mxu0 %v298
  %359 = vmatpush.bf16.msra.mxu0 %v297
  %360 = vmatpush.bf16.msra.mxu0 %v296
  %361 = vmatpush.bf16.msra.mxu0 %v295
  %362 = vmatpush.bf16.msra.mxu0 %v294
  %363 = vmatmul.bf16.gmra.mxu0 %v182
  %v364 = vpop.f32.mrf.mxu0
  %v365 = vadd.f32 %v100, %v364
  %v366 = vpop.f32.mrf.mxu0
  %v367 = vadd.f32 %v100, %v366
  %368 = vmatmul.bf16.gmra.mxu0 %v185
  %v369 = vpop.f32.mrf.mxu0
  %v370 = vadd.f32 %v100, %v369
  %v371 = vpop.f32.mrf.mxu0
  %v372 = vadd.f32 %v100, %v371
  %373 = vmatmul.bf16.gmra.mxu0 %v188
  %v374 = vpop.f32.mrf.mxu0
  %v375 = vadd.f32 %v100, %v374
  %v376 = vpop.f32.mrf.mxu0
  %v377 = vadd.f32 %v100, %v376
  %378 = vmatmul.bf16.gmra.mxu0 %v191
  %v379 = vpop.f32.mrf.mxu0
  %v380 = vadd.f32 %v100, %v379
  %v381 = vpop.f32.mrf.mxu0
  %v382 = vadd.f32 %v100, %v381
  %383 = vmatmul.bf16.gmra.mxu0 %v194
  %v384 = vpop.f32.mrf.mxu0
  %v385 = vadd.f32 %v100, %v384
  %v386 = vpop.f32.mrf.mxu0
  %v387 = vadd.f32 %v100, %v386
  %388 = vmatmul.bf16.gmra.mxu0 %v197
  %v389 = vpop.f32.mrf.mxu0
  %v390 = vadd.f32 %v100, %v389
  %v391 = vpop.f32.mrf.mxu0
  %v392 = vadd.f32 %v100, %v391
  %393 = vmatmul.bf16.gmra.mxu0 %v200
  %v394 = vpop.f32.mrf.mxu0
  %v395 = vadd.f32 %v100, %v394
  %v396 = vpop.f32.mrf.mxu0
  %v397 = vadd.f32 %v100, %v396
  %398 = vmatmul.bf16.gmra.mxu0 %v203
  %v399 = vpop.f32.mrf.mxu0
  %v400 = vadd.f32 %v100, %v399
  %v401 = vpop.f32.mrf.mxu0
  %v402 = vadd.f32 %v100, %v401
  %403 = vdwg.mxu0
  %404 = vmatpush.bf16.msra.mxu0 %v309
  %405 = vmatpush.bf16.msra.mxu0 %v308
  %406 = vmatpush.bf16.msra.mxu0 %v307
  %407 = vmatpush.bf16.msra.mxu0 %v306
  %408 = vmatpush.bf16.msra.mxu0 %v305
  %409 = vmatpush.bf16.msra.mxu0 %v304
  %410 = vmatpush.bf16.msra.mxu0 %v303
  %411 = vmatpush.bf16.msra.mxu0 %v302
  %412 = vmatmul.bf16.gmra.mxu0 %v183
  %v413 = vpop.f32.mrf.mxu0
  %v414 = vadd.f32 %v365, %v413
  %v415 = vpop.f32.mrf.mxu0
  %v416 = vadd.f32 %v367, %v415
  %417 = vmatmul.bf16.gmra.mxu0 %v186
  %v418 = vpop.f32.mrf.mxu0
  %v419 = vadd.f32 %v370, %v418
  %v420 = vpop.f32.mrf.mxu0
  %v421 = vadd.f32 %v372, %v420
  %422 = vmatmul.bf16.gmra.mxu0 %v189
  %v423 = vpop.f32.mrf.mxu0
  %v424 = vadd.f32 %v375, %v423
  %v425 = vpop.f32.mrf.mxu0
  %v426 = vadd.f32 %v377, %v425
  %427 = vmatmul.bf16.gmra.mxu0 %v192
  %v428 = vpop.f32.mrf.mxu0
  %v429 = vadd.f32 %v380, %v428
  %v430 = vpop.f32.mrf.mxu0
  %v431 = vadd.f32 %v382, %v430
  %432 = vmatmul.bf16.gmra.mxu0 %v195
  %v433 = vpop.f32.mrf.mxu0
  %v434 = vadd.f32 %v385, %v433
  %v435 = vpop.f32.mrf.mxu0
  %v436 = vadd.f32 %v387, %v435
  %437 = vmatmul.bf16.gmra.mxu0 %v198
  %v438 = vpop.f32.mrf.mxu0
  %v439 = vadd.f32 %v390, %v438
  %v440 = vpop.f32.mrf.mxu0
  %v441 = vadd.f32 %v392, %v440
  %442 = vmatmul.bf16.gmra.mxu0 %v201
  %v443 = vpop.f32.mrf.mxu0
  %v444 = vadd.f32 %v395, %v443
  %v445 = vpop.f32.mrf.mxu0
  %v446 = vadd.f32 %v397, %v445
  %447 = vmatmul.bf16.gmra.mxu0 %v204
  %v448 = vpop.f32.mrf.mxu0
  %v449 = vadd.f32 %v400, %v448
  %v450 = vpop.f32.mrf.mxu0
  %v451 = vadd.f32 %v402, %v450
  %452 = vdwg.mxu0
  %453 = vmatpush.bf16.msra.mxu0 0
  %454 = vmatpush.bf16.msra.mxu0 0
  %455 = vmatpush.bf16.msra.mxu0 0
  %456 = vmatpush.bf16.msra.mxu0 0
  %457 = vmatpush.bf16.msra.mxu0 0
  %458 = vmatpush.bf16.msra.mxu0 0
  %459 = vmatpush.bf16.msra.mxu0 %v311
  %460 = vmatpush.bf16.msra.mxu0 %v310
  %461 = vmatmul.bf16.gmra.mxu0 %v332
  %v462 = vpop.f32.mrf.mxu0
  %v463 = vadd.f32 %v414, %v462
  %v464 = vpop.f32.mrf.mxu0
  %v465 = vadd.f32 %v416, %v464
  %466 = vmatmul.bf16.gmra.mxu0 %v335
  %v467 = vpop.f32.mrf.mxu0
  %v468 = vadd.f32 %v419, %v467
  %v469 = vpop.f32.mrf.mxu0
  %v470 = vadd.f32 %v421, %v469
  %471 = vmatmul.bf16.gmra.mxu0 %v338
  %v472 = vpop.f32.mrf.mxu0
  %v473 = vadd.f32 %v424, %v472
  %v474 = vpop.f32.mrf.mxu0
  %v475 = vadd.f32 %v426, %v474
  %476 = vmatmul.bf16.gmra.mxu0 %v341
  %v477 = vpop.f32.mrf.mxu0
  %v478 = vadd.f32 %v429, %v477
  %v479 = vpop.f32.mrf.mxu0
  %v480 = vadd.f32 %v431, %v479
  %481 = vmatmul.bf16.gmra.mxu0 %v344
  %v482 = vpop.f32.mrf.mxu0
  %v483 = vadd.f32 %v434, %v482
  %v484 = vpop.f32.mrf.mxu0
  %v485 = vadd.f32 %v436, %v484
  %486 = vmatmul.bf16.gmra.mxu0 %v347
  %v487 = vpop.f32.mrf.mxu0
  %v488 = vadd.f32 %v439, %v487
  %v489 = vpop.f32.mrf.mxu0
  %v490 = vadd.f32 %v441, %v489
  %491 = vmatmul.bf16.gmra.mxu0 %v350
  %v492 = vpop.f32.mrf.mxu0
  %v493 = vadd.f32 %v444, %v492
  %v494 = vpop.f32.mrf.mxu0
  %v495 = vadd.f32 %v446, %v494
  %496 = vmatmul.bf16.gmra.mxu0 %v353
  %v497 = vpop.f32.mrf.mxu0
  %v498 = vadd.f32 %v449, %v497
  %v499 = vpop.f32.mrf.mxu0
  %v500 = vadd.f32 %v451, %v499
  %501 = vdwg.mxu0
  %v502 = vmin.f32 %v463, 0.0
  %v503 = vmin.f32 %v465, 0.0
  %v504 = vmin.f32 %v468, 0.0
  %v505 = vmin.f32 %v470, 0.0
  %v506 = vmin.f32 %v473, 0.0
  %v507 = vmin.f32 %v475, 0.0
  %v508 = vmin.f32 %v478, 0.0
  %v509 = vmin.f32 %v480, 0.0
  %v510 = vmin.f32 %v483, 0.0
  %v511 = vmin.f32 %v485, 0.0
  %v512 = vmin.f32 %v488, 0.0
  %v513 = vmin.f32 %v490, 0.0
  %v514 = vmin.f32 %v493, 0.0
  %v515 = vmin.f32 %v495, 0.0
  %v516 = vmin.f32 %v498, 0.0
  %v517 = vmin.f32 %v500, 0.0
  %v518 = vmul.f32 %v502, 1.442695
  %v519 = vpow.pop %v518
  %v520 = vmul.f32 %v503, 1.442695
  %v521 = vpow.pop %v520
  %v522 = vmul.f32 %v504, 1.442695
  %v523 = vpow.pop %v522
  %v524 = vmul.f32 %v505, 1.442695
  %v525 = vpow.pop %v524
  %v526 = vmul.f32 %v506, 1.442695
  %v527 = vpow.pop %v526
  %v528 = vmul.f32 %v507, 1.442695
  %v529 = vpow.pop %v528
  %v530 = vmul.f32 %v508, 1.442695
  %v531 = vpow.pop %v530
  %v532 = vmul.f32 %v509, 1.442695
  %v533 = vpow.pop %v532
  %v534 = vmul.f32 %v510, 1.442695
  %v535 = vpow.pop %v534
  %v536 = vmul.f32 %v511, 1.442695
  %v537 = vpow.pop %v536
  %v538 = vmul.f32 %v512, 1.442695
  %v539 = vpow.pop %v538
  %v540 = vmul.f32 %v513, 1.442695
  %v541 = vpow.pop %v540
  %v542 = vmul.f32 %v514, 1.442695
  %v543 = vpow.pop %v542
  %v544 = vmul.f32 %v515, 1.442695
  %v545 = vpow.pop %v544
  %v546 = vmul.f32 %v516, 1.442695
  %v547 = vpow.pop %v546
  %v548 = vmul.f32 %v517, 1.442695
  %v549 = vpow.pop %v548
  %v550 = vsub.f32 %v519, 1.0
  %v551 = vsub.f32 %v521, 1.0
  %v552 = vsub.f32 %v523, 1.0
  %v553 = vsub.f32 %v525, 1.0
  %v554 = vsub.f32 %v527, 1.0
  %v555 = vsub.f32 %v529, 1.0
  %v556 = vsub.f32 %v531, 1.0
  %v557 = vsub.f32 %v533, 1.0
  %v558 = vsub.f32 %v535, 1.0
  %v559 = vsub.f32 %v537, 1.0
  %v560 = vsub.f32 %v539, 1.0
  %v561 = vsub.f32 %v541, 1.0
  %v562 = vsub.f32 %v543, 1.0
  %v563 = vsub.f32 %v545, 1.0
  %v564 = vsub.f32 %v547, 1.0
  %v565 = vsub.f32 %v549, 1.0
  %v566 = vmul.f32 %v550, 1.6732632
  %v567 = vmul.f32 %v551, 1.6732632
  %v568 = vmul.f32 %v552, 1.6732632
  %v569 = vmul.f32 %v553, 1.6732632
  %v570 = vmul.f32 %v554, 1.6732632
  %v571 = vmul.f32 %v555, 1.6732632
  %v572 = vmul.f32 %v556, 1.6732632
  %v573 = vmul.f32 %v557, 1.6732632
  %v574 = vmul.f32 %v558, 1.6732632
  %v575 = vmul.f32 %v559, 1.6732632
  %v576 = vmul.f32 %v560, 1.6732632
  %v577 = vmul.f32 %v561, 1.6732632
  %v578 = vmul.f32 %v562, 1.6732632
  %v579 = vmul.f32 %v563, 1.6732632
  %v580 = vmul.f32 %v564, 1.6732632
  %v581 = vmul.f32 %v565, 1.6732632
  %vm582 = vcmp.gt.f32.partialorder %v463, 0.0
  %vm583 = vcmp.gt.f32.partialorder %v465, 0.0
  %vm584 = vcmp.gt.f32.partialorder %v468, 0.0
  %vm585 = vcmp.gt.f32.partialorder %v470, 0.0
  %vm586 = vcmp.gt.f32.partialorder %v473, 0.0
  %vm587 = vcmp.gt.f32.partialorder %v475, 0.0
  %vm588 = vcmp.gt.f32.partialorder %v478, 0.0
  %vm589 = vcmp.gt.f32.partialorder %v480, 0.0
  %vm590 = vcmp.gt.f32.partialorder %v483, 0.0
  %vm591 = vcmp.gt.f32.partialorder %v485, 0.0
  %vm592 = vcmp.gt.f32.partialorder %v488, 0.0
  %vm593 = vcmp.gt.f32.partialorder %v490, 0.0
  %vm594 = vcmp.gt.f32.partialorder %v493, 0.0
  %vm595 = vcmp.gt.f32.partialorder %v495, 0.0
  %vm596 = vcmp.gt.f32.partialorder %v498, 0.0
  %vm597 = vcmp.gt.f32.partialorder %v500, 0.0
  %v598 = vsel %vm582, %v463, %v566
  %v599 = vsel %vm583, %v465, %v567
  %v600 = vsel %vm584, %v468, %v568
  %v601 = vsel %vm585, %v470, %v569
  %v602 = vsel %vm586, %v473, %v570
  %v603 = vsel %vm587, %v475, %v571
  %v604 = vsel %vm588, %v478, %v572
  %v605 = vsel %vm589, %v480, %v573
  %v606 = vsel %vm590, %v483, %v574
  %v607 = vsel %vm591, %v485, %v575
  %v608 = vsel %vm592, %v488, %v576
  %v609 = vsel %vm593, %v490, %v577
  %v610 = vsel %vm594, %v493, %v578
  %v611 = vsel %vm595, %v495, %v579
  %v612 = vsel %vm596, %v498, %v580
  %v613 = vsel %vm597, %v500, %v581
  %v614 = vmul.f32 %v598, 1.050701
  %v615 = vmul.f32 %v599, 1.050701
  %v616 = vmul.f32 %v600, 1.050701
  %v617 = vmul.f32 %v601, 1.050701
  %v618 = vmul.f32 %v602, 1.050701
  %v619 = vmul.f32 %v603, 1.050701
  %v620 = vmul.f32 %v604, 1.050701
  %v621 = vmul.f32 %v605, 1.050701
  %v622 = vmul.f32 %v606, 1.050701
  %v623 = vmul.f32 %v607, 1.050701
  %v624 = vmul.f32 %v608, 1.050701
  %v625 = vmul.f32 %v609, 1.050701
  %v626 = vmul.f32 %v610, 1.050701
  %v627 = vmul.f32 %v611, 1.050701
  %v628 = vmul.f32 %v612, 1.050701
  %v629 = vmul.f32 %v613, 1.050701
  %v630 = vpack.c.bf16 %v614, %v614
  %v631 = vpack.c.bf16 %v615, %v615
  %v632 = vpack.c.bf16 %v616, %v616
  %v633 = vpack.c.bf16 %v617, %v617
  %v634 = vpack.c.bf16 %v618, %v618
  %v635 = vpack.c.bf16 %v619, %v619
  %v636 = vpack.c.bf16 %v620, %v620
  %v637 = vpack.c.bf16 %v621, %v621
  %v638 = vpack.c.bf16 %v622, %v622
  %v639 = vpack.c.bf16 %v623, %v623
  %v640 = vpack.c.bf16 %v624, %v624
  %v641 = vpack.c.bf16 %v625, %v625
  %v642 = vpack.c.bf16 %v626, %v626
  %v643 = vpack.c.bf16 %v627, %v627
  %v644 = vpack.c.bf16 %v628, %v628
  %v645 = vpack.c.bf16 %v629, %v629
  %vm646 = vcmask 519168
  %647 = vst.msk [vmem:[%s7] sm:$0xf] %vm646, %v630
  %648 = vst.msk [vmem:[%s7 + $0x4] sm:$0xf] %vm646, %v631
  %649 = vst.msk [vmem:[%s7 + $0x8] sm:$0xf] %vm646, %v632
  %650 = vst.msk [vmem:[%s7 + $0xc] sm:$0xf] %vm646, %v633
  %651 = vst.msk [vmem:[%s7 + $0x10] sm:$0xf] %vm646, %v634
  %652 = vst.msk [vmem:[%s7 + $0x14] sm:$0xf] %vm646, %v635
  %653 = vst.msk [vmem:[%s7 + $0x18] sm:$0xf] %vm646, %v636
  %654 = vst.msk [vmem:[%s7 + $0x1c] sm:$0xf] %vm646, %v637
  %655 = vst.msk [vmem:[%s7 + $0x20] sm:$0xf] %vm646, %v638
  %656 = vst.msk [vmem:[%s7 + $0x24] sm:$0xf] %vm646, %v639
  %657 = vst.msk [vmem:[%s7 + $0x28] sm:$0xf] %vm646, %v640
  %658 = vst.msk [vmem:[%s7 + $0x2c] sm:$0xf] %vm646, %v641
  %659 = vst.msk [vmem:[%s7 + $0x30] sm:$0xf] %vm646, %v642
  %660 = vst.msk [vmem:[%s7 + $0x34] sm:$0xf] %vm646, %v643
  %661 = vst.msk [vmem:[%s7 + $0x38] sm:$0xf] %vm646, %v644
  %662 = vst.msk [vmem:[%s7 + $0x3c] sm:$0xf] %vm646, %v645
  %v663 = vpack.c.bf16 %v615, %v614
  %v664 = vpack.c.bf16 %v617, %v616
  %v665 = vld [vmem:[%s3] sm:$0xf]
  %v666 = vld [vmem:[%s3 + $0x4] sm:$0xf]
  %v667 = vld [vmem:[%s3 + $0x8] sm:$0xf]
  %v668 = vld [vmem:[%s3 + $0xc] sm:$0xf]
  %v669 = vld [vmem:[%s3 + $0x10] sm:$0xf]
  %v670 = vld [vmem:[%s3 + $0x14] sm:$0xf]
  %v671 = vld [vmem:[%s3 + $0x18] sm:$0xf]
  %v672 = vld [vmem:[%s3 + $0x1c] sm:$0xf]
  %v673 = vpack.c.bf16 %v619, %v618
  %v674 = vpack.c.bf16 %v621, %v620
  %s675 = scalar_lea.vmem %s3, 32
  %v676 = vld [vmem:[%s675] sm:$0xf]
  %v677 = vld [vmem:[%s675 + $0x4] sm:$0xf]
  %v678 = vld [vmem:[%s675 + $0x8] sm:$0xf]
  %v679 = vld [vmem:[%s675 + $0xc] sm:$0xf]
  %v680 = vld [vmem:[%s675 + $0x10] sm:$0xf]
  %v681 = vld [vmem:[%s675 + $0x14] sm:$0xf]
  %v682 = vld [vmem:[%s675 + $0x18] sm:$0xf]
  %v683 = vld [vmem:[%s675 + $0x1c] sm:$0xf]
  %v692 = vunpack.c.l.b16 %v676
  %v693 = vunpack.c.l.b16 %v677
  %v694 = vunpack.c.l.b16 %v678
  %v695 = vunpack.c.l.b16 %v679
  %v696 = vunpack.c.l.b16 %v680
  %v697 = vunpack.c.l.b16 %v681
  %v698 = vunpack.c.l.b16 %v682
  %v699 = vunpack.c.l.b16 %v683
  %v700 = vpack.c.b16 %v693, %v692
  %v701 = vpack.c.b16 %v695, %v694
  %v702 = vpack.c.b16 %v697, %v696
  %v703 = vpack.c.b16 %v699, %v698
  %vm708 = vcmask 523264
  %v710 = vsel %vm708, %v673, 0
  %v713 = vsel %vm708, %v674, 0
  %715 = vmatpush.bf16.msra.mxu0 0
  %716 = vmatpush.bf16.msra.mxu0 0
  %717 = vmatpush.bf16.msra.mxu0 0
  %718 = vmatpush.bf16.msra.mxu0 0
  %719 = vmatpush.bf16.msra.mxu0 %v703
  %720 = vmatpush.bf16.msra.mxu0 %v702
  %721 = vmatpush.bf16.msra.mxu0 %v701
  %722 = vmatpush.bf16.msra.mxu0 %v700
  %723 = vmatmul.bf16.gmra.mxu0 %v710
  %v724 = vpop.f32.mrf.mxu0
  %v725 = vadd.f32 0.0, %v724
  %v726 = vpop.f32.mrf.mxu0
  %v727 = vadd.f32 0.0, %v726
  %728 = vmatmul.bf16.gmra.mxu0 %v713
  %v729 = vpop.f32.mrf.mxu0
  %v730 = vadd.f32 0.0, %v729
  %v731 = vpop.f32.mrf.mxu0
  %v732 = vadd.f32 0.0, %v731
  %733 = vdwg.mxu0
  %v742 = vunpack.c.l.b16 %v665
  %v743 = vunpack.c.l.b16 %v666
  %v744 = vunpack.c.l.b16 %v667
  %v745 = vunpack.c.l.b16 %v668
  %v746 = vunpack.c.l.b16 %v669
  %v747 = vunpack.c.l.b16 %v670
  %v748 = vunpack.c.l.b16 %v671
  %v749 = vunpack.c.l.b16 %v672
  %v750 = vpack.c.b16 %v743, %v742
  %v751 = vpack.c.b16 %v745, %v744
  %v752 = vpack.c.b16 %v747, %v746
  %v753 = vpack.c.b16 %v749, %v748
  %v759 = vsel %vm708, %v663, 0
  %v762 = vsel %vm708, %v664, 0
  %764 = vmatpush.bf16.msra.mxu0 0
  %765 = vmatpush.bf16.msra.mxu0 0
  %766 = vmatpush.bf16.msra.mxu0 0
  %767 = vmatpush.bf16.msra.mxu0 0
  %768 = vmatpush.bf16.msra.mxu0 %v753
  %769 = vmatpush.bf16.msra.mxu0 %v752
  %770 = vmatpush.bf16.msra.mxu0 %v751
  %771 = vmatpush.bf16.msra.mxu0 %v750
  %772 = vmatmul.bf16.gmra.mxu0 %v759
  %v773 = vpop.f32.mrf.mxu0
  %v774 = vadd.f32 %v725, %v773
  %v775 = vpop.f32.mrf.mxu0
  %v776 = vadd.f32 %v727, %v775
  %777 = vmatmul.bf16.gmra.mxu0 %v762
  %v778 = vpop.f32.mrf.mxu0
  %v779 = vadd.f32 %v730, %v778
  %v780 = vpop.f32.mrf.mxu0
  %v781 = vadd.f32 %v732, %v780
  %782 = vdwg.mxu0
  %v783 = vpack.c.bf16 %v623, %v622
  %v784 = vpack.c.bf16 %v625, %v624
  %s785 = scalar_lea.vmem %s3, 64
  %v786 = vld [vmem:[%s785] sm:$0xf]
  %v787 = vld [vmem:[%s785 + $0x4] sm:$0xf]
  %v788 = vld [vmem:[%s785 + $0x8] sm:$0xf]
  %v789 = vld [vmem:[%s785 + $0xc] sm:$0xf]
  %v790 = vld [vmem:[%s785 + $0x10] sm:$0xf]
  %v791 = vld [vmem:[%s785 + $0x14] sm:$0xf]
  %v792 = vld [vmem:[%s785 + $0x18] sm:$0xf]
  %v793 = vld [vmem:[%s785 + $0x1c] sm:$0xf]
  %v802 = vunpack.c.l.b16 %v786
  %v803 = vunpack.c.l.b16 %v787
  %v804 = vunpack.c.l.b16 %v788
  %v805 = vunpack.c.l.b16 %v789
  %v806 = vunpack.c.l.b16 %v790
  %v807 = vunpack.c.l.b16 %v791
  %v808 = vunpack.c.l.b16 %v792
  %v809 = vunpack.c.l.b16 %v793
  %v810 = vpack.c.b16 %v803, %v802
  %v811 = vpack.c.b16 %v805, %v804
  %v812 = vpack.c.b16 %v807, %v806
  %v813 = vpack.c.b16 %v809, %v808
  %v819 = vsel %vm708, %v783, 0
  %v822 = vsel %vm708, %v784, 0
  %824 = vmatpush.bf16.msra.mxu0 0
  %825 = vmatpush.bf16.msra.mxu0 0
  %826 = vmatpush.bf16.msra.mxu0 0
  %827 = vmatpush.bf16.msra.mxu0 0
  %828 = vmatpush.bf16.msra.mxu0 %v813
  %829 = vmatpush.bf16.msra.mxu0 %v812
  %830 = vmatpush.bf16.msra.mxu0 %v811
  %831 = vmatpush.bf16.msra.mxu0 %v810
  %832 = vmatmul.bf16.gmra.mxu0 %v819
  %v833 = vpop.f32.mrf.mxu0
  %v834 = vadd.f32 0.0, %v833
  %v835 = vpop.f32.mrf.mxu0
  %v836 = vadd.f32 0.0, %v835
  %837 = vmatmul.bf16.gmra.mxu0 %v822
  %v838 = vpop.f32.mrf.mxu0
  %v839 = vadd.f32 0.0, %v838
  %v840 = vpop.f32.mrf.mxu0
  %v841 = vadd.f32 0.0, %v840
  %842 = vdwg.mxu0
  %v843 = vadd.f32 %v774, %v834
  %v844 = vadd.f32 %v776, %v836
  %v845 = vadd.f32 %v779, %v839
  %v846 = vadd.f32 %v781, %v841
  %v847 = vpack.c.bf16 %v627, %v626
  %v848 = vpack.c.bf16 %v629, %v628
  %s849 = scalar_lea.vmem %s3, 96
  %v850 = vld [vmem:[%s849] sm:$0xf]
  %v851 = vld [vmem:[%s849 + $0x4] sm:$0xf]
  %v852 = vld [vmem:[%s849 + $0x8] sm:$0xf]
  %v853 = vld [vmem:[%s849 + $0xc] sm:$0xf]
  %v854 = vld [vmem:[%s849 + $0x10] sm:$0xf]
  %v855 = vld [vmem:[%s849 + $0x14] sm:$0xf]
  %v856 = vld [vmem:[%s849 + $0x18] sm:$0xf]
  %v857 = vld [vmem:[%s849 + $0x1c] sm:$0xf]
  %v866 = vunpack.c.l.b16 %v850
  %v867 = vunpack.c.l.b16 %v851
  %v868 = vunpack.c.l.b16 %v852
  %v869 = vunpack.c.l.b16 %v853
  %v870 = vunpack.c.l.b16 %v854
  %v871 = vunpack.c.l.b16 %v855
  %v872 = vunpack.c.l.b16 %v856
  %v873 = vunpack.c.l.b16 %v857
  %v874 = vpack.c.b16 %v867, %v866
  %v875 = vpack.c.b16 %v869, %v868
  %v876 = vpack.c.b16 %v871, %v870
  %v877 = vpack.c.b16 %v873, %v872
  %v883 = vsel %vm708, %v847, 0
  %v886 = vsel %vm708, %v848, 0
  %888 = vmatpush.bf16.msra.mxu0 0
  %889 = vmatpush.bf16.msra.mxu0 0
  %890 = vmatpush.bf16.msra.mxu0 0
  %891 = vmatpush.bf16.msra.mxu0 0
  %892 = vmatpush.bf16.msra.mxu0 %v877
  %893 = vmatpush.bf16.msra.mxu0 %v876
  %894 = vmatpush.bf16.msra.mxu0 %v875
  %895 = vmatpush.bf16.msra.mxu0 %v874
  %896 = vmatmul.bf16.gmra.mxu0 %v883
  %v897 = vpop.f32.mrf.mxu0
  %v898 = vadd.f32 0.0, %v897
  %v899 = vpop.f32.mrf.mxu0
  %v900 = vadd.f32 0.0, %v899
  %901 = vmatmul.bf16.gmra.mxu0 %v886
  %v902 = vpop.f32.mrf.mxu0
  %v903 = vadd.f32 0.0, %v902
  %v904 = vpop.f32.mrf.mxu0
  %v905 = vadd.f32 0.0, %v904
  %906 = vdwg.mxu0
  %v907 = vadd.f32 %v843, %v898
  %v908 = vadd.f32 %v844, %v900
  %v909 = vadd.f32 %v845, %v903
  %v910 = vadd.f32 %v846, %v905
  %v911 = vld [vmem:[%s4] sm:$0x1]
  %v913 = vperm.slane %v911, 0
  %v915 = vadd.f32 %v907, %v913
  %v916 = vadd.f32 %v908, %v913
  %v917 = vadd.f32 %v909, %v913
  %v918 = vadd.f32 %v910, %v913
  %v919 = vmin.f32 %v915, 0.0
  %v920 = vmin.f32 %v916, 0.0
  %v921 = vmin.f32 %v917, 0.0
  %v922 = vmin.f32 %v918, 0.0
  %v923 = vmul.f32 %v919, 1.442695
  %v924 = vpow.pop %v923
  %v925 = vmul.f32 %v920, 1.442695
  %v926 = vpow.pop %v925
  %v927 = vmul.f32 %v921, 1.442695
  %v928 = vpow.pop %v927
  %v929 = vmul.f32 %v922, 1.442695
  %v930 = vpow.pop %v929
  %v931 = vsub.f32 %v924, 1.0
  %v932 = vsub.f32 %v926, 1.0
  %v933 = vsub.f32 %v928, 1.0
  %v934 = vsub.f32 %v930, 1.0
  %v935 = vmul.f32 %v931, 1.6732632
  %v936 = vmul.f32 %v932, 1.6732632
  %v937 = vmul.f32 %v933, 1.6732632
  %v938 = vmul.f32 %v934, 1.6732632
  %vm939 = vcmp.gt.f32.partialorder %v915, 0.0
  %vm940 = vcmp.gt.f32.partialorder %v916, 0.0
  %vm941 = vcmp.gt.f32.partialorder %v917, 0.0
  %vm942 = vcmp.gt.f32.partialorder %v918, 0.0
  %v943 = vsel %vm939, %v915, %v935
  %v944 = vsel %vm940, %v916, %v936
  %v945 = vsel %vm941, %v917, %v937
  %v946 = vsel %vm942, %v918, %v938
  %v947 = vmul.f32 %v943, 1.050701
  %v948 = vmul.f32 %v944, 1.050701
  %v949 = vmul.f32 %v945, 1.050701
  %v950 = vmul.f32 %v946, 1.050701
  %v951 = vpack.c.bf16 %v947, %v947
  %v952 = vpack.c.bf16 %v948, %v948
  %v953 = vpack.c.bf16 %v949, %v949
  %v954 = vpack.c.bf16 %v950, %v950
  %955 = vst [vmem:[%s8] sm:$0xf] %v951
  %956 = vst [vmem:[%s8 + $0x4] sm:$0xf] %v952
  %957 = vst [vmem:[%s8 + $0x8] sm:$0xf] %v953
  %958 = vst [vmem:[%s8 + $0xc] sm:$0xf] %v954
  %v959 = vld [vmem:[%s5] sm:$0xff]
  %v960 = vld [vmem:[%s5 + $0x8] sm:$0xff]
  %v961 = vld [vmem:[%s5 + $0x10] sm:$0xff]
  %v962 = vld [vmem:[%s5 + $0x18] sm:$0xff]
  %v963 = vld [vmem:[%s5 + $0x20] sm:$0xff]
  %v964 = vld [vmem:[%s5 + $0x28] sm:$0xff]
  %v965 = vld [vmem:[%s5 + $0x30] sm:$0xff]
  %v966 = vld [vmem:[%s5 + $0x38] sm:$0xff]
  %v967 = vld [vmem:[%s5 + $0x40] sm:$0xff]
  %v968 = vld [vmem:[%s5 + $0x48] sm:$0xff]
  %v969 = vld [vmem:[%s5 + $0x50] sm:$0xff]
  %v970 = vld [vmem:[%s5 + $0x58] sm:$0xff]
  %v971 = vld [vmem:[%s5 + $0x60] sm:$0xff]
  %v972 = vld [vmem:[%s5 + $0x68] sm:$0xff]
  %v973 = vld [vmem:[%s5 + $0x70] sm:$0xff]
  %v974 = vld [vmem:[%s5 + $0x78] sm:$0xff]
  %s975 = scalar_lea.vmem %s5, 128
  %v976 = vld [vmem:[%s975] sm:$0xff]
  %v977 = vld [vmem:[%s975 + $0x8] sm:$0xff]
  %v978 = vld [vmem:[%s975 + $0x10] sm:$0xff]
  %v979 = vld [vmem:[%s975 + $0x18] sm:$0xff]
  %v980 = vld [vmem:[%s975 + $0x20] sm:$0xff]
  %v981 = vld [vmem:[%s975 + $0x28] sm:$0xff]
  %v982 = vld [vmem:[%s975 + $0x30] sm:$0xff]
  %v983 = vld [vmem:[%s975 + $0x38] sm:$0xff]
  %v984 = vld [vmem:[%s975 + $0x40] sm:$0xff]
  %v985 = vld [vmem:[%s975 + $0x48] sm:$0xff]
  %v986 = vld [vmem:[%s975 + $0x50] sm:$0xff]
  %v987 = vld [vmem:[%s975 + $0x58] sm:$0xff]
  %v988 = vld [vmem:[%s975 + $0x60] sm:$0xff]
  %v989 = vld [vmem:[%s975 + $0x68] sm:$0xff]
  %v990 = vld [vmem:[%s975 + $0x70] sm:$0xff]
  %v991 = vld [vmem:[%s975 + $0x78] sm:$0xff]
  %v1008 = vunpack.c.l.b16 %v976
  %v1009 = vunpack.c.h.b16 %v976
  %v1010 = vunpack.c.l.b16 %v977
  %v1011 = vunpack.c.h.b16 %v977
  %v1012 = vunpack.c.l.b16 %v978
  %v1013 = vunpack.c.h.b16 %v978
  %v1014 = vunpack.c.l.b16 %v979
  %v1015 = vunpack.c.h.b16 %v979
  %v1016 = vunpack.c.l.b16 %v980
  %v1017 = vunpack.c.h.b16 %v980
  %v1018 = vunpack.c.l.b16 %v981
  %v1019 = vunpack.c.h.b16 %v981
  %v1020 = vunpack.c.l.b16 %v982
  %v1021 = vunpack.c.h.b16 %v982
  %v1022 = vunpack.c.l.b16 %v983
  %v1023 = vunpack.c.h.b16 %v983
  %v1024 = vunpack.c.l.b16 %v984
  %v1025 = vunpack.c.h.b16 %v984
  %v1026 = vunpack.c.l.b16 %v985
  %v1027 = vunpack.c.h.b16 %v985
  %v1028 = vunpack.c.l.b16 %v986
  %v1029 = vunpack.c.h.b16 %v986
  %v1030 = vunpack.c.l.b16 %v987
  %v1031 = vunpack.c.h.b16 %v987
  %v1032 = vunpack.c.l.b16 %v988
  %v1033 = vunpack.c.h.b16 %v988
  %v1034 = vunpack.c.l.b16 %v989
  %v1035 = vunpack.c.h.b16 %v989
  %v1036 = vunpack.c.l.b16 %v990
  %v1037 = vunpack.c.h.b16 %v990
  %v1038 = vunpack.c.l.b16 %v991
  %v1039 = vunpack.c.h.b16 %v991
  %v1040 = vpack.c.b16 %v1010, %v1008
  %v1041 = vpack.c.b16 %v1011, %v1009
  %v1042 = vpack.c.b16 %v1014, %v1012
  %v1043 = vpack.c.b16 %v1015, %v1013
  %v1044 = vpack.c.b16 %v1018, %v1016
  %v1045 = vpack.c.b16 %v1019, %v1017
  %v1046 = vpack.c.b16 %v1022, %v1020
  %v1047 = vpack.c.b16 %v1023, %v1021
  %v1048 = vpack.c.b16 %v1026, %v1024
  %v1049 = vpack.c.b16 %v1027, %v1025
  %v1050 = vpack.c.b16 %v1030, %v1028
  %v1051 = vpack.c.b16 %v1031, %v1029
  %v1052 = vpack.c.b16 %v1034, %v1032
  %v1053 = vpack.c.b16 %v1035, %v1033
  %v1054 = vpack.c.b16 %v1038, %v1036
  %v1055 = vpack.c.b16 %v1039, %v1037
  %1072 = vmatpush.bf16.msra.mxu0 %v1054
  %1073 = vmatpush.bf16.msra.mxu0 %v1052
  %1074 = vmatpush.bf16.msra.mxu0 %v1050
  %1075 = vmatpush.bf16.msra.mxu0 %v1048
  %1076 = vmatpush.bf16.msra.mxu0 %v1046
  %1077 = vmatpush.bf16.msra.mxu0 %v1044
  %1078 = vmatpush.bf16.msra.mxu0 %v1042
  %1079 = vmatpush.bf16.msra.mxu0 %v1040
  %1080 = vmatmul.bf16.gmra.mxu0 %v952
  %v1081 = vpop.f32.mrf.mxu0
  %v1082 = vadd.f32 0.0, %v1081
  %v1083 = vpop.f32.mrf.mxu0
  %1084 = vdwg.mxu0
  %1085 = vmatpush.bf16.msra.mxu0 %v1055
  %1086 = vmatpush.bf16.msra.mxu0 %v1053
  %1087 = vmatpush.bf16.msra.mxu0 %v1051
  %1088 = vmatpush.bf16.msra.mxu0 %v1049
  %1089 = vmatpush.bf16.msra.mxu0 %v1047
  %1090 = vmatpush.bf16.msra.mxu0 %v1045
  %1091 = vmatpush.bf16.msra.mxu0 %v1043
  %1092 = vmatpush.bf16.msra.mxu0 %v1041
  %1093 = vmatmul.bf16.gmra.mxu0 %v952
  %v1094 = vpop.f32.mrf.mxu0
  %v1095 = vadd.f32 0.0, %v1094
  %v1096 = vpop.f32.mrf.mxu0
  %1097 = vdwg.mxu0
  %v1114 = vunpack.c.l.b16 %v959
  %v1115 = vunpack.c.h.b16 %v959
  %v1116 = vunpack.c.l.b16 %v960
  %v1117 = vunpack.c.h.b16 %v960
  %v1118 = vunpack.c.l.b16 %v961
  %v1119 = vunpack.c.h.b16 %v961
  %v1120 = vunpack.c.l.b16 %v962
  %v1121 = vunpack.c.h.b16 %v962
  %v1122 = vunpack.c.l.b16 %v963
  %v1123 = vunpack.c.h.b16 %v963
  %v1124 = vunpack.c.l.b16 %v964
  %v1125 = vunpack.c.h.b16 %v964
  %v1126 = vunpack.c.l.b16 %v965
  %v1127 = vunpack.c.h.b16 %v965
  %v1128 = vunpack.c.l.b16 %v966
  %v1129 = vunpack.c.h.b16 %v966
  %v1130 = vunpack.c.l.b16 %v967
  %v1131 = vunpack.c.h.b16 %v967
  %v1132 = vunpack.c.l.b16 %v968
  %v1133 = vunpack.c.h.b16 %v968
  %v1134 = vunpack.c.l.b16 %v969
  %v1135 = vunpack.c.h.b16 %v969
  %v1136 = vunpack.c.l.b16 %v970
  %v1137 = vunpack.c.h.b16 %v970
  %v1138 = vunpack.c.l.b16 %v971
  %v1139 = vunpack.c.h.b16 %v971
  %v1140 = vunpack.c.l.b16 %v972
  %v1141 = vunpack.c.h.b16 %v972
  %v1142 = vunpack.c.l.b16 %v973
  %v1143 = vunpack.c.h.b16 %v973
  %v1144 = vunpack.c.l.b16 %v974
  %v1145 = vunpack.c.h.b16 %v974
  %v1146 = vpack.c.b16 %v1116, %v1114
  %v1147 = vpack.c.b16 %v1117, %v1115
  %v1148 = vpack.c.b16 %v1120, %v1118
  %v1149 = vpack.c.b16 %v1121, %v1119
  %v1150 = vpack.c.b16 %v1124, %v1122
  %v1151 = vpack.c.b16 %v1125, %v1123
  %v1152 = vpack.c.b16 %v1128, %v1126
  %v1153 = vpack.c.b16 %v1129, %v1127
  %v1154 = vpack.c.b16 %v1132, %v1130
  %v1155 = vpack.c.b16 %v1133, %v1131
  %v1156 = vpack.c.b16 %v1136, %v1134
  %v1157 = vpack.c.b16 %v1137, %v1135
  %v1158 = vpack.c.b16 %v1140, %v1138
  %v1159 = vpack.c.b16 %v1141, %v1139
  %v1160 = vpack.c.b16 %v1144, %v1142
  %v1161 = vpack.c.b16 %v1145, %v1143
  %1178 = vmatpush.bf16.msra.mxu0 %v1160
  %1179 = vmatpush.bf16.msra.mxu0 %v1158
  %1180 = vmatpush.bf16.msra.mxu0 %v1156
  %1181 = vmatpush.bf16.msra.mxu0 %v1154
  %1182 = vmatpush.bf16.msra.mxu0 %v1152
  %1183 = vmatpush.bf16.msra.mxu0 %v1150
  %1184 = vmatpush.bf16.msra.mxu0 %v1148
  %1185 = vmatpush.bf16.msra.mxu0 %v1146
  %1186 = vmatmul.bf16.gmra.mxu0 %v951
  %v1187 = vpop.f32.mrf.mxu0
  %v1188 = vadd.f32 %v1082, %v1187
  %v1189 = vpop.f32.mrf.mxu0
  %1190 = vdwg.mxu0
  %1191 = vmatpush.bf16.msra.mxu0 %v1161
  %1192 = vmatpush.bf16.msra.mxu0 %v1159
  %1193 = vmatpush.bf16.msra.mxu0 %v1157
  %1194 = vmatpush.bf16.msra.mxu0 %v1155
  %1195 = vmatpush.bf16.msra.mxu0 %v1153
  %1196 = vmatpush.bf16.msra.mxu0 %v1151
  %1197 = vmatpush.bf16.msra.mxu0 %v1149
  %1198 = vmatpush.bf16.msra.mxu0 %v1147
  %1199 = vmatmul.bf16.gmra.mxu0 %v951
  %v1200 = vpop.f32.mrf.mxu0
  %v1201 = vadd.f32 %v1095, %v1200
  %v1202 = vpop.f32.mrf.mxu0
  %1203 = vdwg.mxu0
  %s1204 = scalar_lea.vmem %s5, 256
  %v1205 = vld [vmem:[%s1204] sm:$0xff]
  %v1206 = vld [vmem:[%s1204 + $0x8] sm:$0xff]
  %v1207 = vld [vmem:[%s1204 + $0x10] sm:$0xff]
  %v1208 = vld [vmem:[%s1204 + $0x18] sm:$0xff]
  %v1209 = vld [vmem:[%s1204 + $0x20] sm:$0xff]
  %v1210 = vld [vmem:[%s1204 + $0x28] sm:$0xff]
  %v1211 = vld [vmem:[%s1204 + $0x30] sm:$0xff]
  %v1212 = vld [vmem:[%s1204 + $0x38] sm:$0xff]
  %v1213 = vld [vmem:[%s1204 + $0x40] sm:$0xff]
  %v1214 = vld [vmem:[%s1204 + $0x48] sm:$0xff]
  %v1215 = vld [vmem:[%s1204 + $0x50] sm:$0xff]
  %v1216 = vld [vmem:[%s1204 + $0x58] sm:$0xff]
  %v1217 = vld [vmem:[%s1204 + $0x60] sm:$0xff]
  %v1218 = vld [vmem:[%s1204 + $0x68] sm:$0xff]
  %v1219 = vld [vmem:[%s1204 + $0x70] sm:$0xff]
  %v1220 = vld [vmem:[%s1204 + $0x78] sm:$0xff]
  %v1237 = vunpack.c.l.b16 %v1205
  %v1238 = vunpack.c.h.b16 %v1205
  %v1239 = vunpack.c.l.b16 %v1206
  %v1240 = vunpack.c.h.b16 %v1206
  %v1241 = vunpack.c.l.b16 %v1207
  %v1242 = vunpack.c.h.b16 %v1207
  %v1243 = vunpack.c.l.b16 %v1208
  %v1244 = vunpack.c.h.b16 %v1208
  %v1245 = vunpack.c.l.b16 %v1209
  %v1246 = vunpack.c.h.b16 %v1209
  %v1247 = vunpack.c.l.b16 %v1210
  %v1248 = vunpack.c.h.b16 %v1210
  %v1249 = vunpack.c.l.b16 %v1211
  %v1250 = vunpack.c.h.b16 %v1211
  %v1251 = vunpack.c.l.b16 %v1212
  %v1252 = vunpack.c.h.b16 %v1212
  %v1253 = vunpack.c.l.b16 %v1213
  %v1254 = vunpack.c.h.b16 %v1213
  %v1255 = vunpack.c.l.b16 %v1214
  %v1256 = vunpack.c.h.b16 %v1214
  %v1257 = vunpack.c.l.b16 %v1215
  %v1258 = vunpack.c.h.b16 %v1215
  %v1259 = vunpack.c.l.b16 %v1216
  %v1260 = vunpack.c.h.b16 %v1216
  %v1261 = vunpack.c.l.b16 %v1217
  %v1262 = vunpack.c.h.b16 %v1217
  %v1263 = vunpack.c.l.b16 %v1218
  %v1264 = vunpack.c.h.b16 %v1218
  %v1265 = vunpack.c.l.b16 %v1219
  %v1266 = vunpack.c.h.b16 %v1219
  %v1267 = vunpack.c.l.b16 %v1220
  %v1268 = vunpack.c.h.b16 %v1220
  %v1269 = vpack.c.b16 %v1239, %v1237
  %v1270 = vpack.c.b16 %v1240, %v1238
  %v1271 = vpack.c.b16 %v1243, %v1241
  %v1272 = vpack.c.b16 %v1244, %v1242
  %v1273 = vpack.c.b16 %v1247, %v1245
  %v1274 = vpack.c.b16 %v1248, %v1246
  %v1275 = vpack.c.b16 %v1251, %v1249
  %v1276 = vpack.c.b16 %v1252, %v1250
  %v1277 = vpack.c.b16 %v1255, %v1253
  %v1278 = vpack.c.b16 %v1256, %v1254
  %v1279 = vpack.c.b16 %v1259, %v1257
  %v1280 = vpack.c.b16 %v1260, %v1258
  %v1281 = vpack.c.b16 %v1263, %v1261
  %v1282 = vpack.c.b16 %v1264, %v1262
  %v1283 = vpack.c.b16 %v1267, %v1265
  %v1284 = vpack.c.b16 %v1268, %v1266
  %1301 = vmatpush.bf16.msra.mxu0 %v1283
  %1302 = vmatpush.bf16.msra.mxu0 %v1281
  %1303 = vmatpush.bf16.msra.mxu0 %v1279
  %1304 = vmatpush.bf16.msra.mxu0 %v1277
  %1305 = vmatpush.bf16.msra.mxu0 %v1275
  %1306 = vmatpush.bf16.msra.mxu0 %v1273
  %1307 = vmatpush.bf16.msra.mxu0 %v1271
  %1308 = vmatpush.bf16.msra.mxu0 %v1269
  %1309 = vmatmul.bf16.gmra.mxu0 %v953
  %v1310 = vpop.f32.mrf.mxu0
  %v1311 = vadd.f32 0.0, %v1310
  %v1312 = vpop.f32.mrf.mxu0
  %1313 = vdwg.mxu0
  %1314 = vmatpush.bf16.msra.mxu0 %v1284
  %1315 = vmatpush.bf16.msra.mxu0 %v1282
  %1316 = vmatpush.bf16.msra.mxu0 %v1280
  %1317 = vmatpush.bf16.msra.mxu0 %v1278
  %1318 = vmatpush.bf16.msra.mxu0 %v1276
  %1319 = vmatpush.bf16.msra.mxu0 %v1274
  %1320 = vmatpush.bf16.msra.mxu0 %v1272
  %1321 = vmatpush.bf16.msra.mxu0 %v1270
  %1322 = vmatmul.bf16.gmra.mxu0 %v953
  %v1323 = vpop.f32.mrf.mxu0
  %v1324 = vadd.f32 0.0, %v1323
  %v1325 = vpop.f32.mrf.mxu0
  %1326 = vdwg.mxu0
  %v1327 = vadd.f32 %v1188, %v1311
  %v1328 = vadd.f32 %v1201, %v1324
  %s1329 = scalar_lea.vmem %s5, 384
  %v1330 = vld [vmem:[%s1329] sm:$0xff]
  %v1331 = vld [vmem:[%s1329 + $0x8] sm:$0xff]
  %v1332 = vld [vmem:[%s1329 + $0x10] sm:$0xff]
  %v1333 = vld [vmem:[%s1329 + $0x18] sm:$0xff]
  %v1334 = vld [vmem:[%s1329 + $0x20] sm:$0xff]
  %v1335 = vld [vmem:[%s1329 + $0x28] sm:$0xff]
  %v1336 = vld [vmem:[%s1329 + $0x30] sm:$0xff]
  %v1337 = vld [vmem:[%s1329 + $0x38] sm:$0xff]
  %v1338 = vld [vmem:[%s1329 + $0x40] sm:$0xff]
  %v1339 = vld [vmem:[%s1329 + $0x48] sm:$0xff]
  %v1340 = vld [vmem:[%s1329 + $0x50] sm:$0xff]
  %v1341 = vld [vmem:[%s1329 + $0x58] sm:$0xff]
  %v1342 = vld [vmem:[%s1329 + $0x60] sm:$0xff]
  %v1343 = vld [vmem:[%s1329 + $0x68] sm:$0xff]
  %v1344 = vld [vmem:[%s1329 + $0x70] sm:$0xff]
  %v1345 = vld [vmem:[%s1329 + $0x78] sm:$0xff]
  %v1362 = vunpack.c.l.b16 %v1330
  %v1363 = vunpack.c.h.b16 %v1330
  %v1364 = vunpack.c.l.b16 %v1331
  %v1365 = vunpack.c.h.b16 %v1331
  %v1366 = vunpack.c.l.b16 %v1332
  %v1367 = vunpack.c.h.b16 %v1332
  %v1368 = vunpack.c.l.b16 %v1333
  %v1369 = vunpack.c.h.b16 %v1333
  %v1370 = vunpack.c.l.b16 %v1334
  %v1371 = vunpack.c.h.b16 %v1334
  %v1372 = vunpack.c.l.b16 %v1335
  %v1373 = vunpack.c.h.b16 %v1335
  %v1374 = vunpack.c.l.b16 %v1336
  %v1375 = vunpack.c.h.b16 %v1336
  %v1376 = vunpack.c.l.b16 %v1337
  %v1377 = vunpack.c.h.b16 %v1337
  %v1378 = vunpack.c.l.b16 %v1338
  %v1379 = vunpack.c.h.b16 %v1338
  %v1380 = vunpack.c.l.b16 %v1339
  %v1381 = vunpack.c.h.b16 %v1339
  %v1382 = vunpack.c.l.b16 %v1340
  %v1383 = vunpack.c.h.b16 %v1340
  %v1384 = vunpack.c.l.b16 %v1341
  %v1385 = vunpack.c.h.b16 %v1341
  %v1386 = vunpack.c.l.b16 %v1342
  %v1387 = vunpack.c.h.b16 %v1342
  %v1388 = vunpack.c.l.b16 %v1343
  %v1389 = vunpack.c.h.b16 %v1343
  %v1390 = vunpack.c.l.b16 %v1344
  %v1391 = vunpack.c.h.b16 %v1344
  %v1392 = vunpack.c.l.b16 %v1345
  %v1393 = vunpack.c.h.b16 %v1345
  %v1394 = vpack.c.b16 %v1364, %v1362
  %v1395 = vpack.c.b16 %v1365, %v1363
  %v1396 = vpack.c.b16 %v1368, %v1366
  %v1397 = vpack.c.b16 %v1369, %v1367
  %v1398 = vpack.c.b16 %v1372, %v1370
  %v1399 = vpack.c.b16 %v1373, %v1371
  %v1400 = vpack.c.b16 %v1376, %v1374
  %v1401 = vpack.c.b16 %v1377, %v1375
  %v1402 = vpack.c.b16 %v1380, %v1378
  %v1403 = vpack.c.b16 %v1381, %v1379
  %v1404 = vpack.c.b16 %v1384, %v1382
  %v1405 = vpack.c.b16 %v1385, %v1383
  %v1406 = vpack.c.b16 %v1388, %v1386
  %v1407 = vpack.c.b16 %v1389, %v1387
  %v1408 = vpack.c.b16 %v1392, %v1390
  %v1409 = vpack.c.b16 %v1393, %v1391
  %1426 = vmatpush.bf16.msra.mxu0 %v1408
  %1427 = vmatpush.bf16.msra.mxu0 %v1406
  %1428 = vmatpush.bf16.msra.mxu0 %v1404
  %1429 = vmatpush.bf16.msra.mxu0 %v1402
  %1430 = vmatpush.bf16.msra.mxu0 %v1400
  %1431 = vmatpush.bf16.msra.mxu0 %v1398
  %1432 = vmatpush.bf16.msra.mxu0 %v1396
  %1433 = vmatpush.bf16.msra.mxu0 %v1394
  %1434 = vmatmul.bf16.gmra.mxu0 %v954
  %v1435 = vpop.f32.mrf.mxu0
  %v1436 = vadd.f32 0.0, %v1435
  %v1437 = vpop.f32.mrf.mxu0
  %1438 = vdwg.mxu0
  %1439 = vmatpush.bf16.msra.mxu0 %v1409
  %1440 = vmatpush.bf16.msra.mxu0 %v1407
  %1441 = vmatpush.bf16.msra.mxu0 %v1405
  %1442 = vmatpush.bf16.msra.mxu0 %v1403
  %1443 = vmatpush.bf16.msra.mxu0 %v1401
  %1444 = vmatpush.bf16.msra.mxu0 %v1399
  %1445 = vmatpush.bf16.msra.mxu0 %v1397
  %1446 = vmatpush.bf16.msra.mxu0 %v1395
  %1447 = vmatmul.bf16.gmra.mxu0 %v954
  %v1448 = vpop.f32.mrf.mxu0
  %v1449 = vadd.f32 0.0, %v1448
  %v1450 = vpop.f32.mrf.mxu0
  %1451 = vdwg.mxu0
  %v1452 = vadd.f32 %v1327, %v1436
  %v1453 = vadd.f32 %v1328, %v1449
  %v1454 = vld [vmem:[%s6] sm:$0x3]
  %v1456 = vperm.slane %v1454, 0
  %v1457 = vperm.slane %v1454, 1
  %v1460 = vadd.f32 %v1452, %v1456
  %v1461 = vadd.f32 %v1453, %v1457
  %v1462 = vmin.f32 %v1460, 0.0
  %v1463 = vmin.f32 %v1461, 0.0
  %v1464 = vmul.f32 %v1462, 1.442695
  %v1465 = vpow.pop %v1464
  %v1466 = vmul.f32 %v1463, 1.442695
  %v1467 = vpow.pop %v1466
  %v1468 = vsub.f32 %v1465, 1.0
  %v1469 = vsub.f32 %v1467, 1.0
  %v1470 = vmul.f32 %v1468, 1.6732632
  %v1471 = vmul.f32 %v1469, 1.6732632
  %vm1472 = vcmp.gt.f32.partialorder %v1460, 0.0
  %vm1473 = vcmp.gt.f32.partialorder %v1461, 0.0
  %v1474 = vsel %vm1472, %v1460, %v1470
  %v1475 = vsel %vm1473, %v1461, %v1471
  %v1476 = vmul.f32 %v1474, 1.050701
  %v1477 = vmul.f32 %v1475, 1.050701
  %v1478 = vpack.c.bf16 %v1477, %v1476
  %1479 = vst [vmem:[%s9] sm:$0xff] %v1478
  // Predicated region
  $region30: #{cnn_encoder.3} parent=0 // pred_check
    _
  $region31: #{cnn_encoder.3} parent=0 // pred_check_branch
    %1481 = sbr.rel (0) target = $region33
  $region32: #{cnn_encoder.3} parent=0 // pred_region
    _
  $region33: #{cnn_encoder.3} parent=0 // pred_fallthru
    _
  // Predicated region
  $region34: #{cnn_encoder.3} parent=0 // pred_check
    _
  $region35: #{cnn_encoder.3} parent=0 // pred_check_branch
    %1483 = sbr.rel (0) target = $region37
  $region36: #{cnn_encoder.3} parent=0 // pred_region
    _
  $region37: #{cnn_encoder.3} parent=0 // pred_fallthru
    _
  // Predicated region
  $region38: #{cnn_encoder.3} parent=0 // pred_check
    _
  $region39: #{cnn_encoder.3} parent=0 // pred_check_branch
    %1485 = sbr.rel (0) target = $region41
  $region40: #{cnn_encoder.3} parent=0 // pred_region
    _
  $region41: #{cnn_encoder.3} parent=0 // pred_fallthru
    _
  // Predicated region
  $region42: #{cnn_encoder.3} parent=0 // pred_check
    _
  $region43: #{cnn_encoder.3} parent=0 // pred_check_branch
    %1487 = sbr.rel (0) target = $region45
  $region44: #{cnn_encoder.3} parent=0 // pred_region
    _
  $region45: #{cnn_encoder.3} parent=0 // pred_fallthru
    _
  // Predicated region
  $region46: #{cnn_encoder.3} parent=0 // pred_check
    _
  $region47: #{cnn_encoder.3} parent=0 // pred_check_branch
    %1489 = sbr.rel (0) target = $region49
  $region48: #{cnn_encoder.3} parent=0 // pred_region
    _
  $region49: #{cnn_encoder.3} parent=0 // pred_fallthru
    _
  // Predicated region
  $region50: #{cnn_encoder.3} parent=0 // pred_check
    _
  $region51: #{cnn_encoder.3} parent=0 // pred_check_branch
    %1491 = sbr.rel (0) target = $region53
  $region52: #{cnn_encoder.3} parent=0 // pred_region
    _
  $region53: #{cnn_encoder.3} parent=0 // pred_fallthru
    _

</llo_original>
